<compile_context>
chip_gen: v5e
topology: v5e:2x2
jax: 0.10.0
libtpu: 0.0.40
codegen_flags: <defaults>
</compile_context>

<pallas_src>
import numpy as np

import jax
import jax.numpy as jnp
from jax import lax
from jax.experimental import pallas as pl
from jax.experimental.pallas import tpu as pltpu

BN_EPS = 1e-5
LANE = 128
SUBLANE = 8  # fp32 sublane tile


def _round_up(x, m):
    return (x + m - 1) // m * m


def _vmem_limit_bytes(rows, cw, hp, out_pad):
    est = (rows * cw * 4                       # x slab (f32)
           + 2 * rows * 4                      # bn scale/shift columns
           + rows * cw * 4                     # act scratch (f32)
           + rows * 4 * hp * 4                 # proj scratch (f32)
           + 2 * (cw * 4 * hp * 2              # double-buffered bf16 W_ih
                  + hp * 4 * hp * 2            # double-buffered bf16 W_hh
                  + 4 * hp * 4)                # double-buffered bias
           + cw * out_pad * 2 + out_pad * 4    # W_out / b_out
           + rows * out_pad * 4)               # output slab
    return int(min(max(2 * est, 16 * 1024 * 1024), 64 * 1024 * 1024))


# ---------------------------------------------------------------------------
# Fused kernel: (layer 0) BN -> per-grid-step LSTM layer -> (last layer) Linear.
# ---------------------------------------------------------------------------
def make_fused_kernel(num_layers, seq_len, n_pad, in_f, hp, cw, out_pad):
    rows = seq_len * n_pad
    cdt = jnp.bfloat16  # MXU operand dtype

    def kernel(x_ref, scale_ref, shift_ref, w_ih_ref, w_hh_ref, b_ref,
               w_out_ref, b_out_ref, o_ref, act_ref, proj_ref):
        layer = pl.program_id(0)

        # ---- layer 0 only: eval-mode BatchNorm1d over the seq axis as ONE
        #      lane-dense FMA over the time-major slab (row = t*n_pad + n);
        #      padding columns zeroed in the same pass. ----
        @pl.when(layer == 0)
        def _():
            xb = x_ref[...] * scale_ref[...] + shift_ref[...]
            lane = lax.broadcasted_iota(jnp.int32, (rows, cw), 1)
            act_ref[...] = jnp.where(lane < in_f, xb, 0.0)

        # ---- input projection for ALL timesteps of this layer in one MXU call
        #      (bf16 operands, fp32 accumulate); bias folded here, out of the loop.
        proj_ref[...] = jnp.dot(act_ref[...].astype(cdt), w_ih_ref[...],
                                preferred_element_type=jnp.float32) + b_ref[...]

        # ---- serial recurrence: fori_loop carrying (h, c); every slab access is
        #      an 8-row-aligned full-lane tile. Gate order i, f, g, o (PyTorch);
        #      padded gate lanes stay exactly 0 in h/c (zero weight/bias padding).
        def step(t, carry):
            h, c = carry                                        # fp32 (n_pad, hp)
            row = pl.multiple_of(t * n_pad, SUBLANE)
            gates = proj_ref[pl.ds(row, n_pad), :] + jnp.dot(
                h.astype(cdt), w_hh_ref[...],
                preferred_element_type=jnp.float32)             # (n_pad, 4*hp)
            i_g = jax.nn.sigmoid(gates[:, 0 * hp:1 * hp])
            f_g = jax.nn.sigmoid(gates[:, 1 * hp:2 * hp])
            g_g = jnp.tanh(gates[:, 2 * hp:3 * hp])
            o_g = jax.nn.sigmoid(gates[:, 3 * hp:4 * hp])
            c = f_g * c + i_g * g_g
            h = o_g * jnp.tanh(c)
            act_ref[pl.ds(row, n_pad), 0:hp] = h                # next layer's input
            return h, c

        z = jnp.zeros((n_pad, hp), jnp.float32)
        lax.fori_loop(0, seq_len, step, (z, z))
        # TODO(synk): inter-layer dropout(p=0.1) is a no-op in eval mode.

        # ---- last layer only: output Linear as one lane-dense 2-D slab store. ----
        @pl.when(layer == num_layers - 1)
        def _():
            o_ref[...] = jnp.dot(act_ref[...].astype(cdt), w_out_ref[...],
                                 preferred_element_type=jnp.float32) + b_out_ref[...]

    return kernel


# ---------------------------------------------------------------------------
# One-time parameter preparation (transpose, fold biases, pad, stack per layer).
# ---------------------------------------------------------------------------
def prepare_params(params):
    h_dim = params["lstm"][0]["w_hh"].shape[1]
    in_f = params["lstm"][0]["w_ih"].shape[1]
    out_f = params["out_w"].shape[0]
    hp = _round_up(h_dim, LANE)                 # padded per-gate width
    cw = max(_round_up(in_f, LANE), hp)         # activation-slab lane width
    out_pad = _round_up(out_f, LANE)            # lane-dense output width

    def pad_gate_cols(w_t):                     # (rows, 4H) -> (rows, 4*hp)
        blocks = [w_t[:, k * h_dim:(k + 1) * h_dim] for k in range(4)]
        return jnp.concatenate(
            [jnp.pad(b, ((0, 0), (0, hp - h_dim))) for b in blocks], axis=1)

    w_ih_l, w_hh_l, b_l = [], [], []
    for lp in params["lstm"]:
        w_ih_t = pad_gate_cols(lp["w_ih"].T.astype(jnp.float32))
        w_ih_t = jnp.pad(w_ih_t, ((0, cw - w_ih_t.shape[0]), (0, 0)))      # (cw, 4hp)
        w_hh_t = pad_gate_cols(lp["w_hh"].T.astype(jnp.float32))
        w_hh_t = jnp.pad(w_hh_t, ((0, hp - h_dim), (0, 0)))                # (hp, 4hp)
        b = (lp["b_ih"] + lp["b_hh"]).astype(jnp.float32)                  # fold biases
        b = jnp.concatenate(
            [jnp.pad(b[k * h_dim:(k + 1) * h_dim], (0, hp - h_dim))
             for k in range(4)]).reshape(1, 4 * hp)
        w_ih_l.append(w_ih_t.astype(jnp.bfloat16))
        w_hh_l.append(w_hh_t.astype(jnp.bfloat16))
        b_l.append(b)

    bn_scale = (params["bn_gamma"] *
                lax.rsqrt(params["bn_var"] + BN_EPS)).astype(jnp.float32)
    bn_shift = (params["bn_beta"] - params["bn_mean"] * bn_scale).astype(jnp.float32)
    w_out = jnp.pad(params["out_w"].T.astype(jnp.float32),
                    ((0, cw - h_dim), (0, out_pad - out_f))).astype(jnp.bfloat16)
    out_b = jnp.pad(params["out_b"].astype(jnp.float32),
                    (0, out_pad - out_f)).reshape(1, out_pad)

    return dict(hp=hp, cw=cw, out_pad=out_pad, hidden=h_dim,
                in_features=in_f, out_features=out_f,
                w_ih_all=jnp.stack(w_ih_l),     # (L, cw, 4hp)  bf16
                w_hh_all=jnp.stack(w_hh_l),     # (L, hp, 4hp)  bf16
                b_all=jnp.stack(b_l),           # (L, 1, 4hp)   f32
                bn_scale=bn_scale, bn_shift=bn_shift,
                out_w=w_out, out_b=out_b)


# ---------------------------------------------------------------------------
# Forward: a single pallas_call with a grid over layers.
# ---------------------------------------------------------------------------
def lstmwrapper_forward(prepped, x):
    n, s, f = x.shape
    assert f == prepped["in_features"]
    assert s == prepped["bn_scale"].shape[0], \
        "BatchNorm1d(input_size) on a (batch, seq, input) tensor needs seq == input_size"
    hp, cw, out_pad = prepped["hp"], prepped["cw"], prepped["out_pad"]
    out_f = prepped["out_features"]
    num_layers = prepped["w_ih_all"].shape[0]
    n_pad = _round_up(n, SUBLANE)
    rows = s * n_pad

    # time-major slab: row = t*n_pad + batch_index; batch padded to the fp32
    # sublane tile, features zero-padded to the slab lane width.
    x_t = jnp.transpose(x, (1, 0, 2)).astype(jnp.float32)           # (S, N, F)
    x_slab = jnp.pad(x_t, ((0, 0), (0, n_pad - n), (0, cw - f))).reshape(rows, cw)
    scale_col = jnp.repeat(prepped["bn_scale"], n_pad).reshape(rows, 1)
    shift_col = jnp.repeat(prepped["bn_shift"], n_pad).reshape(rows, 1)

    kernel = make_fused_kernel(num_layers, s, n_pad, f, hp, cw, out_pad)

    grid_spec = pltpu.PrefetchScalarGridSpec(
        num_scalar_prefetch=0,
        grid=(num_layers,),
        in_specs=[
            pl.BlockSpec((rows, cw), lambda l: (0, 0)),              # x slab (fetched once)
            pl.BlockSpec((rows, 1), lambda l: (0, 0)),               # bn scale column
            pl.BlockSpec((rows, 1), lambda l: (0, 0)),               # bn shift column
            pl.BlockSpec((None, cw, 4 * hp), lambda l: (l, 0, 0)),   # W_ih of layer l
            pl.BlockSpec((None, hp, 4 * hp), lambda l: (l, 0, 0)),   # W_hh of layer l
            pl.BlockSpec((None, 1, 4 * hp), lambda l: (l, 0, 0)),    # bias of layer l
            pl.BlockSpec((cw, out_pad), lambda l: (0, 0)),           # W_out
            pl.BlockSpec((1, out_pad), lambda l: (0, 0)),            # b_out
        ],
        out_specs=pl.BlockSpec((rows, out_pad), lambda l: (0, 0)),
        scratch_shapes=[
            pltpu.VMEM((rows, cw), jnp.float32),        # activation slab (persists across layers)
            pltpu.VMEM((rows, 4 * hp), jnp.float32),    # per-layer input projection
        ],
    )

    y_slab = pl.pallas_call(
        kernel,
        out_shape=jax.ShapeDtypeStruct((rows, out_pad), jnp.float32),
        grid_spec=grid_spec,
        compiler_params=pltpu.CompilerParams(
            dimension_semantics=("arbitrary",),
            vmem_limit_bytes=_vmem_limit_bytes(rows, cw, hp, out_pad),
        ),
    )(x_slab, scale_col, shift_col,
      prepped["w_ih_all"], prepped["w_hh_all"], prepped["b_all"],
      prepped["out_w"], prepped["out_b"])

    y = y_slab.reshape(s, n_pad, out_pad)[:, :n, :out_f]            # un-pad
    return jnp.transpose(y, (1, 0, 2))                              # (N, S, out)


# ---------------------------------------------------------------------------
# Parameter init (PyTorch layout) and a pure-numpy reference for checking.
# ---------------------------------------------------------------------------
def init_params(key, input_size, hidden_size, num_layers, output_size):
    keys = jax.random.split(key, 4 * num_layers + 2)
    k = 1.0 / float(hidden_size) ** 0.5
    lstm_layers = []
    for l in range(num_layers):
        in_f = input_size if l == 0 else hidden_size
        k0, k1, k2, k3 = keys[4 * l:4 * l + 4]
        lstm_layers.append(dict(
            w_ih=jax.random.uniform(k0, (4 * hidden_size, in_f), jnp.float32, -k, k),
            w_hh=jax.random.uniform(k1, (4 * hidden_size, hidden_size), jnp.float32, -k, k),
            b_ih=jax.random.uniform(k2, (4 * hidden_size,), jnp.float32, -k, k),
            b_hh=jax.random.uniform(k3, (4 * hidden_size,), jnp.float32, -k, k),
        ))
    kw, kb = keys[-2], keys[-1]
    return dict(
        bn_gamma=jnp.ones((input_size,), jnp.float32),
        bn_beta=jnp.zeros((input_size,), jnp.float32),
        bn_mean=jnp.zeros((input_size,), jnp.float32),
        bn_var=jnp.ones((input_size,), jnp.float32),
        lstm=lstm_layers,
        out_w=jax.random.uniform(kw, (output_size, hidden_size), jnp.float32, -k, k),
        out_b=jax.random.uniform(kb, (output_size,), jnp.float32, -k, k),
    )


def reference_forward(params, x):
    x = np.asarray(x, np.float64)
    n, s, _ = x.shape
    gamma = np.asarray(params["bn_gamma"], np.float64)
    beta = np.asarray(params["bn_beta"], np.float64)
    mean = np.asarray(params["bn_mean"], np.float64)
    var = np.asarray(params["bn_var"], np.float64)
    scale = gamma / np.sqrt(var + BN_EPS)
    h_in = x * scale[None, :, None] + (beta - mean * scale)[None, :, None]

    def sig(z):
        return 1.0 / (1.0 + np.exp(-z))

    for lp in params["lstm"]:
        w_ih = np.asarray(lp["w_ih"], np.float64)
        w_hh = np.asarray(lp["w_hh"], np.float64)
        b = np.asarray(lp["b_ih"], np.float64) + np.asarray(lp["b_hh"], np.float64)
        hd = w_hh.shape[1]
        h = np.zeros((n, hd)); c = np.zeros((n, hd))
        outs = np.zeros((n, s, hd))
        for t in range(s):
            g = h_in[:, t, :] @ w_ih.T + h @ w_hh.T + b
            i = sig(g[:, :hd]); fg = sig(g[:, hd:2 * hd])
            gg = np.tanh(g[:, 2 * hd:3 * hd]); o = sig(g[:, 3 * hd:4 * hd])
            c = fg * c + i * gg
            h = o * np.tanh(c)
            outs[:, t, :] = h
        h_in = outs
    w_out = np.asarray(params["out_w"], np.float64)
    b_out = np.asarray(params["out_b"], np.float64)
    return h_in @ w_out.T + b_out[None, None, :]


if __name__ == "__main__":
    # seq must equal input_size because the module applies BatchNorm1d(input_size)
    # to the (batch, seq, input_size) tensor (it normalizes dim 1 = the seq axis).
    BATCH, SEQ_LEN, INPUT_SIZE = 2, 16, 16
    HIDDEN, NUM_LAYERS, OUTPUT_SIZE = 32, 3, 8

    key = jax.random.PRNGKey(0)
    kx, kp, kb1, kb2, kb3 = jax.random.split(key, 5)
    x = jax.random.normal(kx, (BATCH, SEQ_LEN, INPUT_SIZE), dtype=jnp.float32)
    params = init_params(kp, INPUT_SIZE, HIDDEN, NUM_LAYERS, OUTPUT_SIZE)
    # non-trivial running stats so the eval-mode BN path is actually exercised
    params["bn_gamma"] = 1.0 + 0.1 * jax.random.normal(kb1, (INPUT_SIZE,), jnp.float32)
    params["bn_beta"] = 0.1 * jax.random.normal(kb2, (INPUT_SIZE,), jnp.float32)
    params["bn_mean"] = 0.1 * jax.random.normal(kb3, (INPUT_SIZE,), jnp.float32)
    params["bn_var"] = 1.3 * jnp.ones((INPUT_SIZE,), jnp.float32)

    prepped = prepare_params(params)
    y = lstmwrapper_forward(prepped, x)
    jax.block_until_ready(y)
    assert y.shape == (BATCH, SEQ_LEN, OUTPUT_SIZE)
    assert y.dtype == jnp.float32

    y_ref = reference_forward(params, np.asarray(x))
    # bf16 MXU operands => slightly looser tolerance than pure-f32
    np.testing.assert_allclose(np.asarray(y), y_ref, atol=3e-2, rtol=3e-2)
    print("KERNEL_OK")
</pallas_src>

<mosaic_0001>
module attributes {stable_mosaic.version = 11 : i64} {
  func.func @kernel(%arg0: i32, %arg1: memref<128x128xf32, #tpu.memory_space<vmem>>, %arg2: memref<128x1xf32, #tpu.memory_space<vmem>>, %arg3: memref<128x1xf32, #tpu.memory_space<vmem>>, %arg4: memref<1x128x512xbf16, #tpu.memory_space<vmem>>, %arg5: memref<1x128x512xbf16, #tpu.memory_space<vmem>>, %arg6: memref<1x1x512xf32, #tpu.memory_space<vmem>>, %arg7: memref<128x128xbf16, #tpu.memory_space<vmem>>, %arg8: memref<1x128xf32, #tpu.memory_space<vmem>>, %arg9: memref<128x128xf32, #tpu.memory_space<vmem>>, %arg10: memref<128x128xf32, #tpu.memory_space<vmem>>, %arg11: memref<128x512xf32, #tpu.memory_space<vmem>>) attributes {dimension_semantics = [#tpu.dimension_semantics<arbitrary>], iteration_bounds = array<i64: 3>, scalar_prefetch = 0 : i64, scratch_operands = 2 : i64, tpu.core_type = #tpu.core_type<tc>, window_params = [{pipeline_mode = #tpu.pipeline_mode<synchronous>, transform_indices = @transform_0, window_bounds = array<i64: 128, 128>}, {pipeline_mode = #tpu.pipeline_mode<synchronous>, transform_indices = @transform_1, window_bounds = array<i64: 128, 1>}, {pipeline_mode = #tpu.pipeline_mode<synchronous>, transform_indices = @transform_2, window_bounds = array<i64: 128, 1>}, {transform_indices = @transform_3, window_bounds = array<i64: 1, 128, 512>}, {transform_indices = @transform_4, window_bounds = array<i64: 1, 128, 512>}, {transform_indices = @transform_5, window_bounds = array<i64: 1, 1, 512>}, {pipeline_mode = #tpu.pipeline_mode<synchronous>, transform_indices = @transform_6, window_bounds = array<i64: 128, 128>}, {pipeline_mode = #tpu.pipeline_mode<synchronous>, transform_indices = @transform_7, window_bounds = array<i64: 1, 128>}, {pipeline_mode = #tpu.pipeline_mode<synchronous>, transform_indices = @transform_8, window_bounds = array<i64: 128, 128>}]} {
    %c0_i32 = arith.constant 0 : i32
    %0 = arith.cmpi eq, %arg0, %c0_i32 : i32
    %1 = arith.extui %0 : i1 to i32
    %c0_i32_0 = arith.constant 0 : i32
    %2 = arith.cmpi ne, %1, %c0_i32_0 : i32
    scf.if %2 {
      %c0_14 = arith.constant 0 : index
      %c0_15 = arith.constant 0 : index
      %19 = vector.load %arg1[%c0_14, %c0_15] : memref<128x128xf32, #tpu.memory_space<vmem>>, vector<128x128xf32>
      %c0_16 = arith.constant 0 : index
      %c0_17 = arith.constant 0 : index
      %20 = vector.load %arg2[%c0_16, %c0_17] : memref<128x1xf32, #tpu.memory_space<vmem>>, vector<128x1xf32>
      %21 = vector.broadcast %20 : vector<128x1xf32> to vector<128x128xf32>
      %22 = arith.mulf %19, %21 : vector<128x128xf32>
      %c0_18 = arith.constant 0 : index
      %c0_19 = arith.constant 0 : index
      %23 = vector.load %arg3[%c0_18, %c0_19] : memref<128x1xf32, #tpu.memory_space<vmem>>, vector<128x1xf32>
      %24 = vector.broadcast %23 : vector<128x1xf32> to vector<128x128xf32>
      %25 = arith.addf %22, %24 : vector<128x128xf32>
      %26 = tpu.iota {dimensions = array<i32: 1>} : vector<128x128xi32>
      %c16_i32_20 = arith.constant 16 : i32
      %27 = vector.broadcast %c16_i32_20 : i32 to vector<128x128xi32>
      %28 = arith.cmpi slt, %26, %27 : vector<128x128xi32>
      %cst_21 = arith.constant 0.000000e+00 : f32
      %29 = vector.broadcast %cst_21 : f32 to vector<128x128xf32>
      %30 = arith.select %28, %25, %29 : vector<128x128xi1>, vector<128x128xf32>
      %c0_22 = arith.constant 0 : index
      %c0_23 = arith.constant 0 : index
      %31 = vector.load %arg10[%c0_22, %c0_23] : memref<128x128xf32, #tpu.memory_space<vmem>>, vector<128x128xf32>
      tpu.vector_store %arg10[%c0_22, %c0_23], %30 {strides = array<i32>} : memref<128x128xf32, #tpu.memory_space<vmem>>, vector<128x128xf32>,
    } else {
    }
    %c0 = arith.constant 0 : index
    %c0_1 = arith.constant 0 : index
    %3 = vector.load %arg10[%c0, %c0_1] : memref<128x128xf32, #tpu.memory_space<vmem>>, vector<128x128xf32>
    %4 = arith.truncf %3 : vector<128x128xf32> to vector<128x128xbf16>
    %c0_2 = arith.constant 0 : index
    %c0_3 = arith.constant 0 : index
    %c0_4 = arith.constant 0 : index
    %5 = vector.load %arg4[%c0_2, %c0_3, %c0_4] : memref<1x128x512xbf16, #tpu.memory_space<vmem>>, vector<1x128x512xbf16>
    %6 = vector.shape_cast %5 : vector<1x128x512xbf16> to vector<128x512xbf16>
    %cst = arith.constant dense<0.000000e+00> : vector<128x512xf32>
    %7 = tpu.matmul %4, %6, %cst {dimension_numbers = #tpu.dot_dimension_numbers<[1], [0], [0], [1], [0, 0, 1, 1], [], []>} : vector<128x128xbf16>, vector<128x512xbf16>, vector<128x512xf32> -> vector<128x512xf32>
    %c0_5 = arith.constant 0 : index
    %c0_6 = arith.constant 0 : index
    %c0_7 = arith.constant 0 : index
    %8 = vector.load %arg6[%c0_5, %c0_6, %c0_7] : memref<1x1x512xf32, #tpu.memory_space<vmem>>, vector<1x1x512xf32>
    %9 = vector.shape_cast %8 : vector<1x1x512xf32> to vector<1x512xf32>
    %10 = vector.broadcast %9 : vector<1x512xf32> to vector<128x512xf32>
    %11 = arith.addf %7, %10 : vector<128x512xf32>
    %c0_8 = arith.constant 0 : index
    %c0_9 = arith.constant 0 : index
    %12 = vector.load %arg11[%c0_8, %c0_9] : memref<128x512xf32, #tpu.memory_space<vmem>>, vector<128x512xf32>
    tpu.vector_store %arg11[%c0_8, %c0_9], %11 {strides = array<i32>} : memref<128x512xf32, #tpu.memory_space<vmem>>, vector<128x512xf32>,
    %cst_10 = arith.constant 0.000000e+00 : f32
    %13 = vector.broadcast %cst_10 : f32 to vector<8x128xf32>
    %c0_i32_11 = arith.constant 0 : i32
    %c16_i32 = arith.constant 16 : i32
    %14 = arith.addi %c0_i32_11, %c16_i32 : i32
    %c1_i32 = arith.constant 1 : i32
    %15:2 = scf.for %arg12 = %c0_i32_11 to %14 step %c1_i32 iter_args(%arg13 = %13, %arg14 = %13) -> (vector<8x128xf32>, vector<8x128xf32>)  : i32 {
      %c8_i32 = arith.constant 8 : i32
      %19 = arith.muli %arg12, %c8_i32 : i32
      %20 = tpu.assume_multiple %19, 8 : i32
      %21 = arith.index_cast %20 : i32 to index
      %c0_14 = arith.constant 0 : index
      %22 = vector.load %arg11[%21, %c0_14] : memref<128x512xf32, #tpu.memory_space<vmem>>, vector<8x512xf32>
      %23 = arith.truncf %arg13 : vector<8x128xf32> to vector<8x128xbf16>
      %c0_15 = arith.constant 0 : index
      %c0_16 = arith.constant 0 : index
      %c0_17 = arith.constant 0 : index
      %24 = vector.load %arg5[%c0_15, %c0_16, %c0_17] : memref<1x128x512xbf16, #tpu.memory_space<vmem>>, vector<1x128x512xbf16>
      %25 = vector.shape_cast %24 : vector<1x128x512xbf16> to vector<128x512xbf16>
      %cst_18 = arith.constant dense<0.000000e+00> : vector<8x512xf32>
      %26 = tpu.matmul %23, %25, %cst_18 {dimension_numbers = #tpu.dot_dimension_numbers<[1], [0], [0], [1], [0, 0, 1, 1], [], []>} : vector<8x128xbf16>, vector<128x512xbf16>, vector<8x512xf32> -> vector<8x512xf32>
      %27 = arith.addf %22, %26 : vector<8x512xf32>
      %28 = vector.extract_strided_slice %27 {offsets = [0, 0], sizes = [8, 128], strides = [1, 1]} : vector<8x512xf32> to vector<8x128xf32>
      %29 = arith.negf %28 : vector<8x128xf32>
      %30 = math.exp %29 : vector<8x128xf32>
      %cst_19 = arith.constant 1.000000e+00 : f32
      %31 = vector.broadcast %cst_19 : f32 to vector<8x128xf32>
      %32 = arith.addf %31, %30 : vector<8x128xf32>
      %33 = arith.divf %31, %32 : vector<8x128xf32>
      %34 = vector.extract_strided_slice %27 {offsets = [0, 128], sizes = [8, 128], strides = [1, 1]} : vector<8x512xf32> to vector<8x128xf32>
      %35 = arith.negf %34 : vector<8x128xf32>
      %36 = math.exp %35 : vector<8x128xf32>
      %cst_20 = arith.constant 1.000000e+00 : f32
      %37 = vector.broadcast %cst_20 : f32 to vector<8x128xf32>
      %38 = arith.addf %37, %36 : vector<8x128xf32>
      %39 = arith.divf %37, %38 : vector<8x128xf32>
      %40 = vector.extract_strided_slice %27 {offsets = [0, 256], sizes = [8, 128], strides = [1, 1]} : vector<8x512xf32> to vector<8x128xf32>
      %41 = math.tanh %40 : vector<8x128xf32>
      %42 = vector.extract_strided_slice %27 {offsets = [0, 384], sizes = [8, 128], strides = [1, 1]} : vector<8x512xf32> to vector<8x128xf32>
      %43 = arith.negf %42 : vector<8x128xf32>
      %44 = math.exp %43 : vector<8x128xf32>
      %cst_21 = arith.constant 1.000000e+00 : f32
      %45 = vector.broadcast %cst_21 : f32 to vector<8x128xf32>
      %46 = arith.addf %45, %44 : vector<8x128xf32>
      %47 = arith.divf %45, %46 : vector<8x128xf32>
      %48 = arith.mulf %39, %arg14 : vector<8x128xf32>
      %49 = arith.mulf %33, %41 : vector<8x128xf32>
      %50 = arith.addf %48, %49 : vector<8x128xf32>
      %51 = math.tanh %50 : vector<8x128xf32>
      %52 = arith.mulf %47, %51 : vector<8x128xf32>
      %53 = arith.index_cast %20 : i32 to index
      %c0_22 = arith.constant 0 : index
      %54 = vector.load %arg10[%53, %c0_22] : memref<128x128xf32, #tpu.memory_space<vmem>>, vector<8x128xf32>
      tpu.vector_store %arg10[%53, %c0_22], %52 {strides = array<i32>} : memref<128x128xf32, #tpu.memory_space<vmem>>, vector<8x128xf32>,
      scf.yield %52, %50 : vector<8x128xf32>, vector<8x128xf32>
    }
    %c16_i32_12 = arith.constant 16 : i32
    %c2_i32 = arith.constant 2 : i32
    %16 = arith.cmpi eq, %arg0, %c2_i32 : i32
    %17 = arith.extui %16 : i1 to i32
    %c0_i32_13 = arith.constant 0 : i32
    %18 = arith.cmpi ne, %17, %c0_i32_13 : i32
    scf.if %18 {
      %c0_14 = arith.constant 0 : index
      %c0_15 = arith.constant 0 : index
      %19 = vector.load %arg10[%c0_14, %c0_15] : memref<128x128xf32, #tpu.memory_space<vmem>>, vector<128x128xf32>
      %20 = arith.truncf %19 : vector<128x128xf32> to vector<128x128xbf16>
      %c0_16 = arith.constant 0 : index
      %c0_17 = arith.constant 0 : index
      %21 = vector.load %arg7[%c0_16, %c0_17] : memref<128x128xbf16, #tpu.memory_space<vmem>>, vector<128x128xbf16>
      %cst_18 = arith.constant dense<0.000000e+00> : vector<128x128xf32>
      %22 = tpu.matmul %20, %21, %cst_18 {dimension_numbers = #tpu.dot_dimension_numbers<[1], [0], [0], [1], [0, 0, 1, 1], [], []>} : vector<128x128xbf16>, vector<128x128xbf16>, vector<128x128xf32> -> vector<128x128xf32>
      %c0_19 = arith.constant 0 : index
      %c0_20 = arith.constant 0 : index
      %23 = vector.load %arg8[%c0_19, %c0_20] : memref<1x128xf32, #tpu.memory_space<vmem>>, vector<1x128xf32>
      %24 = vector.broadcast %23 : vector<1x128xf32> to vector<128x128xf32>
      %25 = arith.addf %22, %24 : vector<128x128xf32>
      %c0_21 = arith.constant 0 : index
      %c0_22 = arith.constant 0 : index
      %26 = vector.load %arg9[%c0_21, %c0_22] : memref<128x128xf32, #tpu.memory_space<vmem>>, vector<128x128xf32>
      tpu.vector_store %arg9[%c0_21, %c0_22], %25 {strides = array<i32>} : memref<128x128xf32, #tpu.memory_space<vmem>>, vector<128x128xf32>,
    } else {
    }
    return
  }
  func.func @transform_0(%arg0: i32) -> (i32, i32) {
    %c0_i32 = arith.constant 0 : i32
    %c0_i32_0 = arith.constant 0 : i32
    %c0_i32_1 = arith.constant 0 : i32
    return %c0_i32, %c0_i32_0 : i32, i32
  }
  func.func @transform_1(%arg0: i32) -> (i32, i32) {
    %c0_i32 = arith.constant 0 : i32
    %c0_i32_0 = arith.constant 0 : i32
    %c0_i32_1 = arith.constant 0 : i32
    return %c0_i32, %c0_i32_0 : i32, i32
  }
  func.func @transform_2(%arg0: i32) -> (i32, i32) {
    %c0_i32 = arith.constant 0 : i32
    %c0_i32_0 = arith.constant 0 : i32
    %c0_i32_1 = arith.constant 0 : i32
    return %c0_i32, %c0_i32_0 : i32, i32
  }
  func.func @transform_3(%arg0: i32) -> (i32, i32, i32) {
    %c0_i32 = arith.constant 0 : i32
    %c0_i32_0 = arith.constant 0 : i32
    %c0_i32_1 = arith.constant 0 : i32
    return %arg0, %c0_i32, %c0_i32_0 : i32, i32, i32
  }
  func.func @transform_4(%arg0: i32) -> (i32, i32, i32) {
    %c0_i32 = arith.constant 0 : i32
    %c0_i32_0 = arith.constant 0 : i32
    %c0_i32_1 = arith.constant 0 : i32
    return %arg0, %c0_i32, %c0_i32_0 : i32, i32, i32
  }
  func.func @transform_5(%arg0: i32) -> (i32, i32, i32) {
    %c0_i32 = arith.constant 0 : i32
    %c0_i32_0 = arith.constant 0 : i32
    %c0_i32_1 = arith.constant 0 : i32
    return %arg0, %c0_i32, %c0_i32_0 : i32, i32, i32
  }
  func.func @transform_6(%arg0: i32) -> (i32, i32) {
    %c0_i32 = arith.constant 0 : i32
    %c0_i32_0 = arith.constant 0 : i32
    %c0_i32_1 = arith.constant 0 : i32
    return %c0_i32, %c0_i32_0 : i32, i32
  }
  func.func @transform_7(%arg0: i32) -> (i32, i32) {
    %c0_i32 = arith.constant 0 : i32
    %c0_i32_0 = arith.constant 0 : i32
    %c0_i32_1 = arith.constant 0 : i32
    return %c0_i32, %c0_i32_0 : i32, i32
  }
  func.func @transform_8(%arg0: i32) -> (i32, i32) {
    %c0_i32 = arith.constant 0 : i32
    %c0_i32_0 = arith.constant 0 : i32
    %c0_i32_1 = arith.constant 0 : i32
    return %c0_i32, %c0_i32_0 : i32, i32
  }
}

</mosaic_0001>

<llo_original>
// kernel: tpu_custom_call.1
$region0: #{tpu_custom_call.1}
  #allocation0 [shape = 'u32[]', space=smem, size = 0x4, offset = 0x4, fixed_abs, tag = 'smem constant byte address 0x4 - core index']
  #allocation1 [shape = 'u32[72,128]{1,0:T(1,128)}', space=vmem, size = 0x9000, scoped, tag = 'internal scratch']
  #allocation2 [shape = 'f32[128,128]{1,0:T(8,128)}', space=vmem, size = 0x10000, scoped, tag = 'scratch operand']
  #allocation3 [shape = 'f32[128,512]{1,0:T(8,128)}', space=vmem, size = 0x40000, scoped, tag = 'scratch operand']
  %s0 = inlined_call_operand.vmem [shape: f32[128,128], index: 0, kind: input, shape index: {}]
  %s1 = inlined_call_operand.vmem [shape: f32[128,1], index: 1, kind: input, shape index: {}]
  %s2 = inlined_call_operand.vmem [shape: f32[128,1], index: 2, kind: input, shape index: {}]
  %s3 = inlined_call_operand.hbm [shape: bf16[3,128,512], index: 3, kind: input, shape index: {}]
  %s4 = inlined_call_operand.hbm [shape: bf16[3,128,512], index: 4, kind: input, shape index: {}]
  %s5 = inlined_call_operand.vmem [shape: f32[3,1,512], index: 5, kind: input, shape index: {}]
  %s6 = inlined_call_operand.vmem [shape: bf16[128,128], index: 6, kind: input, shape index: {}]
  %s7 = inlined_call_operand.vmem [shape: f32[1,128], index: 7, kind: input, shape index: {}]
  %s8 = inlined_call_operand.hbm [shape: f32[128,128], index: 8, kind: output, shape index: {}]
  %s9 = sld [smem:[#allocation0]]
  $region88: #{tpu_custom_call.1} parent=0
    _
  %s11 = ssub.s32 1, %s9
  %s12 = scalar_select 0, %s11, %s9
  $region1: #{tpu_custom_call.1} parent=0
    #allocation4 [shape = 'u8[262144]{0}', space=vmem, size = 0x40000, scoped, tag = 'input window, operand 3']
    #allocation5 [shape = 's32[2]{0}', space=sflag, size = 0x8, scoped, tag = 'scoped memory for tpu_custom_call.1']
    #allocation6 [shape = 's32[2]{0}', space=sflag, size = 0x8, scoped, tag = 'scoped memory for tpu_custom_call.1']
    #allocation7 [shape = 'u8[262144]{0}', space=vmem, size = 0x40000, scoped, tag = 'input window, operand 4']
    #allocation8 [shape = 's32[2]{0}', space=sflag, size = 0x8, scoped, tag = 'scoped memory for tpu_custom_call.1']
    #allocation9 [shape = 'u8[65536]{0}', space=vmem, size = 0x10000, scoped, tag = 'output window, operand 0, single buffered']
    %13 = vsyncpa [#allocation5], 0
    %s14 = scalar_lea.sflag [#allocation5], 1
    %15 = vsyncpa %s14, 0
    %16 = vsyncpa [#allocation8], 0
    %s17 = scalar_lea.sflag [#allocation8], 1
    %18 = vsyncpa %s17, 0
    %19 = vsyncpa [#allocation6], 0
    loop: start=0, step=1, limit=5
    $region2: #{tpu_custom_call.1} parent=1 // loop_pre_header
      _
    $region3: #{tpu_custom_call.1} parent=1 // loop_header
      %s21 = sphi 0, %s25
      %p22 = scmp.ge.s32.totalorder %s21, 5
      %s29 = sphi 0, %s29
      %s31 = sphi 0, %s29
      %s32 = sphi 0, %s31
      %s46 = sphi 0, %s32
      %s50 = sphi 0, %s50
      %s52 = sphi 0, %s50
      %s53 = sphi 0, %s52
      %s67 = sphi 0, %s53
      %s71 = sphi 0, %s71
      %s73 = sphi 0, %s71
      %s74 = sphi 0, %s73
      %s88 = sphi 0, %s74
      %s94 = sphi 0, %s96
      %s97 = sphi 0, %s94
      %s98 = sphi 0, %s97
      %s114 = sphi 0, %s98
      %s120 = sphi 0, %s122
      %s123 = sphi 0, %s120
      %s124 = sphi 0, %s123
      %s140 = sphi 0, %s124
      %s146 = sphi 0, %s148
      %s149 = sphi 0, %s146
      %s150 = sphi 0, %s149
      %s166 = sphi 0, %s150
      %s170 = sphi 0, %s170
      %s172 = sphi 0, %s170
      %s173 = sphi 0, %s172
      %s187 = sphi 0, %s173
      %s191 = sphi 0, %s191
      %s193 = sphi 0, %s191
      %s194 = sphi 0, %s193
      %s208 = sphi 0, %s194
      %s212 = sphi 0, %s212
      %s214 = sphi 0, %s212
      %s215 = sphi 0, %s214
      %s229 = sphi 0, %s215
    $region4: #{tpu_custom_call.1} parent=1 // loop_header_branch
      %24 = sbr.rel (%p22) target = $region8
    $region5: #{tpu_custom_call.1} parent=1 // loop_body
      %s26 = ssub.s32 %s21, 1
      %s27 = ssub.s32 %s21, 2
      %s28 = sadd.s32 %s21, 1
      %s30 = sadd.s32 %s29, 1
      %p33 = scmp.eq.s32.totalorder %s21, 2
      %p34 = scmp.ne.s32.totalorder %s29, %s31
      %p35 = scmp.eq.s32.totalorder %s21, 0
      %p36 = por %p34, %p35
      %p37 = scmp.ne.s32.totalorder %s29, %s31
      %p38 = scmp.eq.s32.totalorder %s26, 2
      %p39 = por %p37, %p38
      %p40 = scmp.ne.s32.totalorder %s31, %s32
      %p41 = scmp.eq.s32.totalorder %s26, 0
      %p42 = por %p40, %p41
      %p43 = scmp.ne.s32.totalorder %s31, %s32
      %p44 = scmp.eq.s32.totalorder %s27, 2
      %p45 = por %p43, %p44
      %p47 = scmp.ne.s32.totalorder %s32, %s46
      %p48 = scmp.eq.s32.totalorder %s27, 0
      %p49 = por %p47, %p48
      %s51 = sadd.s32 %s50, 1
      %p54 = scmp.eq.s32.totalorder %s21, 2
      %p55 = scmp.ne.s32.totalorder %s50, %s52
      %p56 = scmp.eq.s32.totalorder %s21, 0
      %p57 = por %p55, %p56
      %p58 = scmp.ne.s32.totalorder %s50, %s52
      %p59 = scmp.eq.s32.totalorder %s26, 2
      %p60 = por %p58, %p59
      %p61 = scmp.ne.s32.totalorder %s52, %s53
      %p62 = scmp.eq.s32.totalorder %s26, 0
      %p63 = por %p61, %p62
      %p64 = scmp.ne.s32.totalorder %s52, %s53
      %p65 = scmp.eq.s32.totalorder %s27, 2
      %p66 = por %p64, %p65
      %p68 = scmp.ne.s32.totalorder %s53, %s67
      %p69 = scmp.eq.s32.totalorder %s27, 0
      %p70 = por %p68, %p69
      %s72 = sadd.s32 %s71, 1
      %p75 = scmp.eq.s32.totalorder %s21, 2
      %p76 = scmp.ne.s32.totalorder %s71, %s73
      %p77 = scmp.eq.s32.totalorder %s21, 0
      %p78 = por %p76, %p77
      %p79 = scmp.ne.s32.totalorder %s71, %s73
      %p80 = scmp.eq.s32.totalorder %s26, 2
      %p81 = por %p79, %p80
      %p82 = scmp.ne.s32.totalorder %s73, %s74
      %p83 = scmp.eq.s32.totalorder %s26, 0
      %p84 = por %p82, %p83
      %p85 = scmp.ne.s32.totalorder %s73, %s74
      %p86 = scmp.eq.s32.totalorder %s27, 2
      %p87 = por %p85, %p86
      %p89 = scmp.ne.s32.totalorder %s74, %s88
      %p90 = scmp.eq.s32.totalorder %s27, 0
      %p91 = por %p89, %p90
      %s92 = ssub.s32 %s21, %s28
      %p93 = scmp.eq.s32.totalorder %s92, 0
      %s95 = sadd.s32 %s94, 1
      %s96 = scalar_select %p93, %s94, %s95
      %p99 = pneg %p93
      %p100 = scmp.eq.s32.totalorder %s21, 2
      %p101 = por %p99, %p100
      %p102 = scmp.ne.s32.totalorder %s94, %s97
      %p103 = scmp.eq.s32.totalorder %s21, 0
      %p104 = por %p102, %p103
      %p105 = scmp.ne.s32.totalorder %s94, %s97
      %p106 = scmp.eq.s32.totalorder %s26, 2
      %p107 = por %p105, %p106
      %p108 = scmp.ne.s32.totalorder %s97, %s98
      %p109 = scmp.eq.s32.totalorder %s26, 0
      %p110 = por %p108, %p109
      %p111 = scmp.ne.s32.totalorder %s97, %s98
      %p112 = scmp.eq.s32.totalorder %s27, 2
      %p113 = por %p111, %p112
      %p115 = scmp.ne.s32.totalorder %s98, %s114
      %p116 = scmp.eq.s32.totalorder %s27, 0
      %p117 = por %p115, %p116
      %s118 = ssub.s32 %s21, %s28
      %p119 = scmp.eq.s32.totalorder %s118, 0
      %s121 = sadd.s32 %s120, 1
      %s122 = scalar_select %p119, %s120, %s121
      %p125 = pneg %p119
      %p126 = scmp.eq.s32.totalorder %s21, 2
      %p127 = por %p125, %p126
      %p128 = scmp.ne.s32.totalorder %s120, %s123
      %p129 = scmp.eq.s32.totalorder %s21, 0
      %p130 = por %p128, %p129
      %p131 = scmp.ne.s32.totalorder %s120, %s123
      %p132 = scmp.eq.s32.totalorder %s26, 2
      %p133 = por %p131, %p132
      %p134 = scmp.ne.s32.totalorder %s123, %s124
      %p135 = scmp.eq.s32.totalorder %s26, 0
      %p136 = por %p134, %p135
      %p137 = scmp.ne.s32.totalorder %s123, %s124
      %p138 = scmp.eq.s32.totalorder %s27, 2
      %p139 = por %p137, %p138
      %p141 = scmp.ne.s32.totalorder %s124, %s140
      %p142 = scmp.eq.s32.totalorder %s27, 0
      %p143 = por %p141, %p142
      %s144 = ssub.s32 %s21, %s28
      %p145 = scmp.eq.s32.totalorder %s144, 0
      %s147 = sadd.s32 %s146, 1
      %s148 = scalar_select %p145, %s146, %s147
      %p151 = pneg %p145
      %p152 = scmp.eq.s32.totalorder %s21, 2
      %p153 = por %p151, %p152
      %p154 = scmp.ne.s32.totalorder %s146, %s149
      %p155 = scmp.eq.s32.totalorder %s21, 0
      %p156 = por %p154, %p155
      %p157 = scmp.ne.s32.totalorder %s146, %s149
      %p158 = scmp.eq.s32.totalorder %s26, 2
      %p159 = por %p157, %p158
      %p160 = scmp.ne.s32.totalorder %s149, %s150
      %p161 = scmp.eq.s32.totalorder %s26, 0
      %p162 = por %p160, %p161
      %p163 = scmp.ne.s32.totalorder %s149, %s150
      %p164 = scmp.eq.s32.totalorder %s27, 2
      %p165 = por %p163, %p164
      %p167 = scmp.ne.s32.totalorder %s150, %s166
      %p168 = scmp.eq.s32.totalorder %s27, 0
      %p169 = por %p167, %p168
      %s171 = sadd.s32 %s170, 1
      %p174 = scmp.eq.s32.totalorder %s21, 2
      %p175 = scmp.ne.s32.totalorder %s170, %s172
      %p176 = scmp.eq.s32.totalorder %s21, 0
      %p177 = por %p175, %p176
      %p178 = scmp.ne.s32.totalorder %s170, %s172
      %p179 = scmp.eq.s32.totalorder %s26, 2
      %p180 = por %p178, %p179
      %p181 = scmp.ne.s32.totalorder %s172, %s173
      %p182 = scmp.eq.s32.totalorder %s26, 0
      %p183 = por %p181, %p182
      %p184 = scmp.ne.s32.totalorder %s172, %s173
      %p185 = scmp.eq.s32.totalorder %s27, 2
      %p186 = por %p184, %p185
      %p188 = scmp.ne.s32.totalorder %s173, %s187
      %p189 = scmp.eq.s32.totalorder %s27, 0
      %p190 = por %p188, %p189
      %s192 = sadd.s32 %s191, 1
      %p195 = scmp.eq.s32.totalorder %s21, 2
      %p196 = scmp.ne.s32.totalorder %s191, %s193
      %p197 = scmp.eq.s32.totalorder %s21, 0
      %p198 = por %p196, %p197
      %p199 = scmp.ne.s32.totalorder %s191, %s193
      %p200 = scmp.eq.s32.totalorder %s26, 2
      %p201 = por %p199, %p200
      %p202 = scmp.ne.s32.totalorder %s193, %s194
      %p203 = scmp.eq.s32.totalorder %s26, 0
      %p204 = por %p202, %p203
      %p205 = scmp.ne.s32.totalorder %s193, %s194
      %p206 = scmp.eq.s32.totalorder %s27, 2
      %p207 = por %p205, %p206
      %p209 = scmp.ne.s32.totalorder %s194, %s208
      %p210 = scmp.eq.s32.totalorder %s27, 0
      %p211 = por %p209, %p210
      %s213 = sadd.s32 %s212, 1
      %p216 = scmp.eq.s32.totalorder %s21, 2
      %p217 = scmp.ne.s32.totalorder %s212, %s214
      %p218 = scmp.eq.s32.totalorder %s21, 0
      %p219 = por %p217, %p218
      %p220 = scmp.ne.s32.totalorder %s212, %s214
      %p221 = scmp.eq.s32.totalorder %s26, 2
      %p222 = por %p220, %p221
      %p223 = scmp.ne.s32.totalorder %s214, %s215
      %p224 = scmp.eq.s32.totalorder %s26, 0
      %p225 = por %p223, %p224
      %p226 = scmp.ne.s32.totalorder %s214, %s215
      %p227 = scmp.eq.s32.totalorder %s27, 2
      %p228 = por %p226, %p227
      %p230 = scmp.ne.s32.totalorder %s215, %s229
      %p231 = scmp.eq.s32.totalorder %s27, 0
      %p232 = por %p230, %p231
      %p233 = scmp.le.s32.totalorder 1, %s21
      %p234 = scmp.lt.s32.totalorder %s21, 4
      %p235 = pnand %p233, %p234
      %p236 = pneg %p235
      // Predicated region
      $region9: #{tpu_custom_call.1} parent=5 // pred_check
        _
      $region10: #{tpu_custom_call.1} parent=5 // pred_check_branch
        %238 = sbr.rel (%p235) target = $region12
      $region11: #{tpu_custom_call.1} parent=5 // pred_region
        %s239 = ssub.s32 %s21, 1
        // Predicated region
        $region13: #{tpu_custom_call.1} parent=11 // pred_check
          %p240 = pneg %p42
        $region14: #{tpu_custom_call.1} parent=11 // pred_check_branch
          %242 = sbr.rel (%p240) target = $region16
        $region15: #{tpu_custom_call.1} parent=11 // pred_region
          _
        $region16: #{tpu_custom_call.1} parent=11 // pred_fallthru
          _
        // Predicated region
        $region17: #{tpu_custom_call.1} parent=11 // pred_check
          %p243 = pneg %p63
        $region18: #{tpu_custom_call.1} parent=11 // pred_check_branch
          %245 = sbr.rel (%p243) target = $region20
        $region19: #{tpu_custom_call.1} parent=11 // pred_region
          _
        $region20: #{tpu_custom_call.1} parent=11 // pred_fallthru
          _
        // Predicated region
        $region21: #{tpu_custom_call.1} parent=11 // pred_check
          %p246 = pneg %p84
        $region22: #{tpu_custom_call.1} parent=11 // pred_check_branch
          %248 = sbr.rel (%p246) target = $region24
        $region23: #{tpu_custom_call.1} parent=11 // pred_region
          _
        $region24: #{tpu_custom_call.1} parent=11 // pred_fallthru
          _
        // Predicated region
        $region25: #{tpu_custom_call.1} parent=11 // pred_check
          %p249 = pneg %p183
        $region26: #{tpu_custom_call.1} parent=11 // pred_check_branch
          %251 = sbr.rel (%p249) target = $region28
        $region27: #{tpu_custom_call.1} parent=11 // pred_region
          _
        $region28: #{tpu_custom_call.1} parent=11 // pred_fallthru
          _
        // Predicated region
        $region29: #{tpu_custom_call.1} parent=11 // pred_check
          %p252 = pneg %p204
        $region30: #{tpu_custom_call.1} parent=11 // pred_check_branch
          %254 = sbr.rel (%p252) target = $region32
        $region31: #{tpu_custom_call.1} parent=11 // pred_region
          _
        $region32: #{tpu_custom_call.1} parent=11 // pred_fallthru
          _
      $region12: #{tpu_custom_call.1} parent=5 // pred_fallthru
        _
      %p255 = scmp.lt.s32.totalorder %s21, 3
      // Predicated region
      $region33: #{tpu_custom_call.1} parent=5 // pred_check
        %p256 = pneg %p255
      $region34: #{tpu_custom_call.1} parent=5 // pred_check_branch
        %258 = sbr.rel (%p256) target = $region36
      $region35: #{tpu_custom_call.1} parent=5 // pred_region
        // Predicated region
        $region37: #{tpu_custom_call.1} parent=35 // pred_check
          %p259 = pneg %p104
        $region38: #{tpu_custom_call.1} parent=35 // pred_check_branch
          %261 = sbr.rel (%p259) target = $region40
        $region39: #{tpu_custom_call.1} parent=35 // pred_region
          %s262 = sand.u32 %s94, 1
          %s263 = scalar_lea.sflag [#allocation5], %s262
          %s264 = sand.u32 %s94, 1
          %s265 = smul.addr %s264, 256
          %s266 = scalar_lea.vmem [#allocation4], %s265
          %268 = vsyncadd %s263, 0
          %s269 = smul.addr %s21, 64
          %s270 = smul.addr %s269, 4
          %s271 = scalar_lea.hbm %s3, %s270
          %s272 = sshll.u32 %s271, 4
          %s273 = int_to_ptr.hbm [resolvable:$true] %s272
          %s274 = sshll.u32 %s266, 4
          %s275 = int_to_ptr.vmem [resolvable:$true] %s274
          %280 = dma.hbm_to_vmem [thread:$0]  %s273, 4096, %s275, %s263, 256, 256, 16
        $region40: #{tpu_custom_call.1} parent=35 // pred_fallthru
          _
        // Predicated region
        $region41: #{tpu_custom_call.1} parent=35 // pred_check
          %p281 = pneg %p130
        $region42: #{tpu_custom_call.1} parent=35 // pred_check_branch
          %283 = sbr.rel (%p281) target = $region44
        $region43: #{tpu_custom_call.1} parent=35 // pred_region
          %s284 = sand.u32 %s120, 1
          %s285 = scalar_lea.sflag [#allocation8], %s284
          %s286 = sand.u32 %s120, 1
          %s287 = smul.addr %s286, 256
          %s288 = scalar_lea.vmem [#allocation7], %s287
          %290 = vsyncadd %s285, 0
          %s291 = smul.addr %s21, 64
          %s292 = smul.addr %s291, 4
          %s293 = scalar_lea.hbm %s4, %s292
          %s294 = sshll.u32 %s293, 4
          %s295 = int_to_ptr.hbm [resolvable:$true] %s294
          %s296 = sshll.u32 %s288, 4
          %s297 = int_to_ptr.vmem [resolvable:$true] %s296
          %302 = dma.hbm_to_vmem [thread:$0]  %s295, 4096, %s297, %s285, 256, 256, 16
        $region44: #{tpu_custom_call.1} parent=35 // pred_fallthru
          _
        // Predicated region
        $region45: #{tpu_custom_call.1} parent=35 // pred_check
          %p303 = pneg %p156
        $region46: #{tpu_custom_call.1} parent=35 // pred_check_branch
          %305 = sbr.rel (%p303) target = $region48
        $region47: #{tpu_custom_call.1} parent=35 // pred_region
          %p306 = scmp.lt.s32.totalorder %s21, 2
          %s307 = scalar_select %p306, %s21, 2
          %s308 = smul.addr %s307, 4
          %s309 = scalar_lea.vmem %s5, %s308
        $region48: #{tpu_custom_call.1} parent=35 // pred_fallthru
          _
      $region36: #{tpu_custom_call.1} parent=5 // pred_fallthru
        _
      %p310 = scmp.le.s32.totalorder 1, %s21
      %p311 = scmp.lt.s32.totalorder %s21, 4
      %p312 = pnand %p310, %p311
      %p313 = pneg %p312
      // Predicated region
      $region49: #{tpu_custom_call.1} parent=5 // pred_check
        _
      $region50: #{tpu_custom_call.1} parent=5 // pred_check_branch
        %315 = sbr.rel (%p312) target = $region52
      $region51: #{tpu_custom_call.1} parent=5 // pred_region
        %s316 = ssub.s32 %s21, 1
        %s317 = sand.u32 %s97, 1
        %s318 = scalar_lea.sflag [#allocation5], %s317
        %s319 = sand.u32 %s97, 1
        %s320 = smul.addr %s319, 256
        %s321 = scalar_lea.vmem [#allocation4], %s320
        // Predicated region
        $region53: #{tpu_custom_call.1} parent=51 // pred_check
          %p322 = pneg %p110
        $region54: #{tpu_custom_call.1} parent=51 // pred_check_branch
          %324 = sbr.rel (%p322) target = $region56
        $region55: #{tpu_custom_call.1} parent=51 // pred_region
          %326 = dma.done %s318, 4096
        $region56: #{tpu_custom_call.1} parent=51 // pred_fallthru
          _
        %s327 = sand.u32 %s123, 1
        %s328 = scalar_lea.sflag [#allocation8], %s327
        %s329 = sand.u32 %s123, 1
        %s330 = smul.addr %s329, 256
        %s331 = scalar_lea.vmem [#allocation7], %s330
        // Predicated region
        $region57: #{tpu_custom_call.1} parent=51 // pred_check
          %p332 = pneg %p136
        $region58: #{tpu_custom_call.1} parent=51 // pred_check_branch
          %334 = sbr.rel (%p332) target = $region60
        $region59: #{tpu_custom_call.1} parent=51 // pred_region
          %336 = dma.done %s328, 4096
        $region60: #{tpu_custom_call.1} parent=51 // pred_fallthru
          _
        %p337 = pneg %p42
        %p338 = pneg %p39
        %p339 = pneg %p63
        %p340 = pneg %p60
        %p341 = pneg %p84
        %p342 = pneg %p81
        %s343 = sand.u32 %s97, 1
        %s344 = scalar_lea.sflag [#allocation5], %s343
        %s345 = sand.u32 %s97, 1
        %s346 = smul.addr %s345, 256
        %s347 = scalar_lea.vmem [#allocation4], %s346
        %p348 = pneg %p110
        %p349 = pneg %p107
        %s350 = sand.u32 %s123, 1
        %s351 = scalar_lea.sflag [#allocation8], %s350
        %s352 = sand.u32 %s123, 1
        %s353 = smul.addr %s352, 256
        %s354 = scalar_lea.vmem [#allocation7], %s353
        %p355 = pneg %p136
        %p356 = pneg %p133
        %p357 = scmp.lt.s32.totalorder %s26, 2
        %s358 = scalar_select %p357, %s26, 2
        %s359 = smul.addr %s358, 4
        %s360 = scalar_lea.vmem %s5, %s359
        %p361 = pneg %p162
        %p362 = pneg %p159
        %p363 = pneg %p183
        %p364 = pneg %p180
        %p365 = pneg %p204
        %p366 = pneg %p201
        %p367 = pneg %p225
        %p368 = pneg %p222
        %p369 = scmp.lt.s32.totalorder %s26, 2
        %s370 = scalar_select %p369, %s26, 2
        %s371 = smul.addr %s370, 4
        %s372 = scalar_lea.vmem %s5, %s371
        %p373 = scmp.eq.s32.totalorder %s26, 0
        // Predicated region
        $region61: #{tpu_custom_call.1} parent=51 // pred_check
          %p374 = pneg %p373
        $region62: #{tpu_custom_call.1} parent=51 // pred_check_branch
          %376 = sbr.rel (%p374) target = $region64
        $region63: #{tpu_custom_call.1} parent=51 // pred_region
          %v377 = vld [vmem:[%s0] sm:$0xff]
          %v378 = vld [vmem:[%s0 + $0x8] sm:$0xff]
          %v379 = vld [vmem:[%s0 + $0x10] sm:$0xff]
          %v380 = vld [vmem:[%s0 + $0x18] sm:$0xff]
          %v381 = vld [vmem:[%s0 + $0x20] sm:$0xff]
          %v382 = vld [vmem:[%s0 + $0x28] sm:$0xff]
          %v383 = vld [vmem:[%s0 + $0x30] sm:$0xff]
          %v384 = vld [vmem:[%s0 + $0x38] sm:$0xff]
          %v385 = vld [vmem:[%s0 + $0x40] sm:$0xff]
          %v386 = vld [vmem:[%s0 + $0x48] sm:$0xff]
          %v387 = vld [vmem:[%s0 + $0x50] sm:$0xff]
          %v388 = vld [vmem:[%s0 + $0x58] sm:$0xff]
          %v389 = vld [vmem:[%s0 + $0x60] sm:$0xff]
          %v390 = vld [vmem:[%s0 + $0x68] sm:$0xff]
          %v391 = vld [vmem:[%s0 + $0x70] sm:$0xff]
          %v392 = vld [vmem:[%s0 + $0x78] sm:$0xff]
          %v393 = vld [vmem:[%s1] sm:$0xff]
          %v394 = vld [vmem:[%s1 + $0x8] sm:$0xff]
          %v395 = vld [vmem:[%s1 + $0x10] sm:$0xff]
          %v396 = vld [vmem:[%s1 + $0x18] sm:$0xff]
          %v397 = vld [vmem:[%s1 + $0x20] sm:$0xff]
          %v398 = vld [vmem:[%s1 + $0x28] sm:$0xff]
          %v399 = vld [vmem:[%s1 + $0x30] sm:$0xff]
          %v400 = vld [vmem:[%s1 + $0x38] sm:$0xff]
          %v401 = vld [vmem:[%s1 + $0x40] sm:$0xff]
          %v402 = vld [vmem:[%s1 + $0x48] sm:$0xff]
          %v403 = vld [vmem:[%s1 + $0x50] sm:$0xff]
          %v404 = vld [vmem:[%s1 + $0x58] sm:$0xff]
          %v405 = vld [vmem:[%s1 + $0x60] sm:$0xff]
          %v406 = vld [vmem:[%s1 + $0x68] sm:$0xff]
          %v407 = vld [vmem:[%s1 + $0x70] sm:$0xff]
          %v408 = vld [vmem:[%s1 + $0x78] sm:$0xff]
          %410 = vset.pattern.permute.xlu0 0
          %411 = vperm.xlu0 %410, %v393
          %v412 = vpop.permute.xlu0 %411
          %415 = vset.pattern.permute.xlu0 0
          %416 = vperm.xlu0 %415, %v394
          %v417 = vpop.permute.xlu0 %416
          %420 = vset.pattern.permute.xlu0 0
          %421 = vperm.xlu0 %420, %v395
          %v422 = vpop.permute.xlu0 %421
          %425 = vset.pattern.permute.xlu0 0
          %426 = vperm.xlu0 %425, %v396
          %v427 = vpop.permute.xlu0 %426
          %430 = vset.pattern.permute.xlu0 0
          %431 = vperm.xlu0 %430, %v397
          %v432 = vpop.permute.xlu0 %431
          %435 = vset.pattern.permute.xlu0 0
          %436 = vperm.xlu0 %435, %v398
          %v437 = vpop.permute.xlu0 %436
          %440 = vset.pattern.permute.xlu0 0
          %441 = vperm.xlu0 %440, %v399
          %v442 = vpop.permute.xlu0 %441
          %445 = vset.pattern.permute.xlu0 0
          %446 = vperm.xlu0 %445, %v400
          %v447 = vpop.permute.xlu0 %446
          %450 = vset.pattern.permute.xlu0 0
          %451 = vperm.xlu0 %450, %v401
          %v452 = vpop.permute.xlu0 %451
          %455 = vset.pattern.permute.xlu0 0
          %456 = vperm.xlu0 %455, %v402
          %v457 = vpop.permute.xlu0 %456
          %460 = vset.pattern.permute.xlu0 0
          %461 = vperm.xlu0 %460, %v403
          %v462 = vpop.permute.xlu0 %461
          %465 = vset.pattern.permute.xlu0 0
          %466 = vperm.xlu0 %465, %v404
          %v467 = vpop.permute.xlu0 %466
          %470 = vset.pattern.permute.xlu0 0
          %471 = vperm.xlu0 %470, %v405
          %v472 = vpop.permute.xlu0 %471
          %475 = vset.pattern.permute.xlu0 0
          %476 = vperm.xlu0 %475, %v406
          %v477 = vpop.permute.xlu0 %476
          %480 = vset.pattern.permute.xlu0 0
          %481 = vperm.xlu0 %480, %v407
          %v482 = vpop.permute.xlu0 %481
          %485 = vset.pattern.permute.xlu0 0
          %486 = vperm.xlu0 %485, %v408
          %v487 = vpop.permute.xlu0 %486
          %v489 = vmul.f32 %v377, %v412
          %v490 = vmul.f32 %v378, %v417
          %v491 = vmul.f32 %v379, %v422
          %v492 = vmul.f32 %v380, %v427
          %v493 = vmul.f32 %v381, %v432
          %v494 = vmul.f32 %v382, %v437
          %v495 = vmul.f32 %v383, %v442
          %v496 = vmul.f32 %v384, %v447
          %v497 = vmul.f32 %v385, %v452
          %v498 = vmul.f32 %v386, %v457
          %v499 = vmul.f32 %v387, %v462
          %v500 = vmul.f32 %v388, %v467
          %v501 = vmul.f32 %v389, %v472
          %v502 = vmul.f32 %v390, %v477
          %v503 = vmul.f32 %v391, %v482
          %v504 = vmul.f32 %v392, %v487
          %v505 = vld [vmem:[%s2] sm:$0xff]
          %v506 = vld [vmem:[%s2 + $0x8] sm:$0xff]
          %v507 = vld [vmem:[%s2 + $0x10] sm:$0xff]
          %v508 = vld [vmem:[%s2 + $0x18] sm:$0xff]
          %v509 = vld [vmem:[%s2 + $0x20] sm:$0xff]
          %v510 = vld [vmem:[%s2 + $0x28] sm:$0xff]
          %v511 = vld [vmem:[%s2 + $0x30] sm:$0xff]
          %v512 = vld [vmem:[%s2 + $0x38] sm:$0xff]
          %v513 = vld [vmem:[%s2 + $0x40] sm:$0xff]
          %v514 = vld [vmem:[%s2 + $0x48] sm:$0xff]
          %v515 = vld [vmem:[%s2 + $0x50] sm:$0xff]
          %v516 = vld [vmem:[%s2 + $0x58] sm:$0xff]
          %v517 = vld [vmem:[%s2 + $0x60] sm:$0xff]
          %v518 = vld [vmem:[%s2 + $0x68] sm:$0xff]
          %v519 = vld [vmem:[%s2 + $0x70] sm:$0xff]
          %v520 = vld [vmem:[%s2 + $0x78] sm:$0xff]
          %522 = vset.pattern.permute.xlu0 0
          %523 = vperm.xlu0 %522, %v505
          %v524 = vpop.permute.xlu0 %523
          %527 = vset.pattern.permute.xlu0 0
          %528 = vperm.xlu0 %527, %v506
          %v529 = vpop.permute.xlu0 %528
          %532 = vset.pattern.permute.xlu0 0
          %533 = vperm.xlu0 %532, %v507
          %v534 = vpop.permute.xlu0 %533
          %537 = vset.pattern.permute.xlu0 0
          %538 = vperm.xlu0 %537, %v508
          %v539 = vpop.permute.xlu0 %538
          %542 = vset.pattern.permute.xlu0 0
          %543 = vperm.xlu0 %542, %v509
          %v544 = vpop.permute.xlu0 %543
          %547 = vset.pattern.permute.xlu0 0
          %548 = vperm.xlu0 %547, %v510
          %v549 = vpop.permute.xlu0 %548
          %552 = vset.pattern.permute.xlu0 0
          %553 = vperm.xlu0 %552, %v511
          %v554 = vpop.permute.xlu0 %553
          %557 = vset.pattern.permute.xlu0 0
          %558 = vperm.xlu0 %557, %v512
          %v559 = vpop.permute.xlu0 %558
          %562 = vset.pattern.permute.xlu0 0
          %563 = vperm.xlu0 %562, %v513
          %v564 = vpop.permute.xlu0 %563
          %567 = vset.pattern.permute.xlu0 0
          %568 = vperm.xlu0 %567, %v514
          %v569 = vpop.permute.xlu0 %568
          %572 = vset.pattern.permute.xlu0 0
          %573 = vperm.xlu0 %572, %v515
          %v574 = vpop.permute.xlu0 %573
          %577 = vset.pattern.permute.xlu0 0
          %578 = vperm.xlu0 %577, %v516
          %v579 = vpop.permute.xlu0 %578
          %582 = vset.pattern.permute.xlu0 0
          %583 = vperm.xlu0 %582, %v517
          %v584 = vpop.permute.xlu0 %583
          %587 = vset.pattern.permute.xlu0 0
          %588 = vperm.xlu0 %587, %v518
          %v589 = vpop.permute.xlu0 %588
          %592 = vset.pattern.permute.xlu0 0
          %593 = vperm.xlu0 %592, %v519
          %v594 = vpop.permute.xlu0 %593
          %597 = vset.pattern.permute.xlu0 0
          %598 = vperm.xlu0 %597, %v520
          %v599 = vpop.permute.xlu0 %598
          %v601 = vadd.f32 %v489, %v524
          %v602 = vadd.f32 %v490, %v529
          %v603 = vadd.f32 %v491, %v534
          %v604 = vadd.f32 %v492, %v539
          %v605 = vadd.f32 %v493, %v544
          %v606 = vadd.f32 %v494, %v549
          %v607 = vadd.f32 %v495, %v554
          %v608 = vadd.f32 %v496, %v559
          %v609 = vadd.f32 %v497, %v564
          %v610 = vadd.f32 %v498, %v569
          %v611 = vadd.f32 %v499, %v574
          %v612 = vadd.f32 %v500, %v579
          %v613 = vadd.f32 %v501, %v584
          %v614 = vadd.f32 %v502, %v589
          %v615 = vadd.f32 %v503, %v594
          %v616 = vadd.f32 %v504, %v599
          %v617 = vlaneseq
          %v618 = vand.u32 %v617, 127
          %vm619 = vcmp.lt.s32.totalorder %v618, 16
          %v620 = vsel %vm619, %v601, 0.0
          %v621 = vsel %vm619, %v602, 0.0
          %v622 = vsel %vm619, %v603, 0.0
          %v623 = vsel %vm619, %v604, 0.0
          %v624 = vsel %vm619, %v605, 0.0
          %v625 = vsel %vm619, %v606, 0.0
          %v626 = vsel %vm619, %v607, 0.0
          %v627 = vsel %vm619, %v608, 0.0
          %v628 = vsel %vm619, %v609, 0.0
          %v629 = vsel %vm619, %v610, 0.0
          %v630 = vsel %vm619, %v611, 0.0
          %v631 = vsel %vm619, %v612, 0.0
          %v632 = vsel %vm619, %v613, 0.0
          %v633 = vsel %vm619, %v614, 0.0
          %v634 = vsel %vm619, %v615, 0.0
          %v635 = vsel %vm619, %v616, 0.0
          %636 = vst [vmem:[#allocation2] sm:$0xff] %v620
          %637 = vst [vmem:[#allocation2 + $0x8] sm:$0xff] %v621
          %638 = vst [vmem:[#allocation2 + $0x10] sm:$0xff] %v622
          %639 = vst [vmem:[#allocation2 + $0x18] sm:$0xff] %v623
          %640 = vst [vmem:[#allocation2 + $0x20] sm:$0xff] %v624
          %641 = vst [vmem:[#allocation2 + $0x28] sm:$0xff] %v625
          %642 = vst [vmem:[#allocation2 + $0x30] sm:$0xff] %v626
          %643 = vst [vmem:[#allocation2 + $0x38] sm:$0xff] %v627
          %644 = vst [vmem:[#allocation2 + $0x40] sm:$0xff] %v628
          %645 = vst [vmem:[#allocation2 + $0x48] sm:$0xff] %v629
          %646 = vst [vmem:[#allocation2 + $0x50] sm:$0xff] %v630
          %647 = vst [vmem:[#allocation2 + $0x58] sm:$0xff] %v631
          %648 = vst [vmem:[#allocation2 + $0x60] sm:$0xff] %v632
          %649 = vst [vmem:[#allocation2 + $0x68] sm:$0xff] %v633
          %650 = vst [vmem:[#allocation2 + $0x70] sm:$0xff] %v634
          %651 = vst [vmem:[#allocation2 + $0x78] sm:$0xff] %v635
        $region64: #{tpu_custom_call.1} parent=51 // pred_fallthru
          _
        %v652 = vld [vmem:[#allocation2] sm:$0xff]
        %v653 = vld [vmem:[#allocation2 + $0x8] sm:$0xff]
        %v654 = vld [vmem:[#allocation2 + $0x10] sm:$0xff]
        %v655 = vld [vmem:[#allocation2 + $0x18] sm:$0xff]
        %v656 = vld [vmem:[#allocation2 + $0x20] sm:$0xff]
        %v657 = vld [vmem:[#allocation2 + $0x28] sm:$0xff]
        %v658 = vld [vmem:[#allocation2 + $0x30] sm:$0xff]
        %v659 = vld [vmem:[#allocation2 + $0x38] sm:$0xff]
        %v660 = vld [vmem:[#allocation2 + $0x40] sm:$0xff]
        %v661 = vld [vmem:[#allocation2 + $0x48] sm:$0xff]
        %v662 = vld [vmem:[#allocation2 + $0x50] sm:$0xff]
        %v663 = vld [vmem:[#allocation2 + $0x58] sm:$0xff]
        %v664 = vld [vmem:[#allocation2 + $0x60] sm:$0xff]
        %v665 = vld [vmem:[#allocation2 + $0x68] sm:$0xff]
        %v666 = vld [vmem:[#allocation2 + $0x70] sm:$0xff]
        %v667 = vld [vmem:[#allocation2 + $0x78] sm:$0xff]
        %v668 = vpack.c.bf16 %v653, %v652
        %v669 = vpack.c.bf16 %v655, %v654
        %v670 = vpack.c.bf16 %v657, %v656
        %v671 = vpack.c.bf16 %v659, %v658
        %v672 = vpack.c.bf16 %v661, %v660
        %v673 = vpack.c.bf16 %v663, %v662
        %v674 = vpack.c.bf16 %v665, %v664
        %v675 = vpack.c.bf16 %v667, %v666
        %v676 = vld [vmem:[%s321] sm:$0xff]
        %v677 = vld [vmem:[%s321 + $0x8] sm:$0xff]
        %v678 = vld [vmem:[%s321 + $0x10] sm:$0xff]
        %v679 = vld [vmem:[%s321 + $0x18] sm:$0xff]
        %v680 = vld [vmem:[%s321 + $0x20] sm:$0xff]
        %v681 = vld [vmem:[%s321 + $0x28] sm:$0xff]
        %v682 = vld [vmem:[%s321 + $0x30] sm:$0xff]
        %v683 = vld [vmem:[%s321 + $0x38] sm:$0xff]
        %v684 = vld [vmem:[%s321 + $0x40] sm:$0xff]
        %v685 = vld [vmem:[%s321 + $0x48] sm:$0xff]
        %v686 = vld [vmem:[%s321 + $0x50] sm:$0xff]
        %v687 = vld [vmem:[%s321 + $0x58] sm:$0xff]
        %v688 = vld [vmem:[%s321 + $0x60] sm:$0xff]
        %v689 = vld [vmem:[%s321 + $0x68] sm:$0xff]
        %v690 = vld [vmem:[%s321 + $0x70] sm:$0xff]
        %v691 = vld [vmem:[%s321 + $0x78] sm:$0xff]
        %v692 = vld [vmem:[%s321 + $0x80] sm:$0xff]
        %v693 = vld [vmem:[%s321 + $0x88] sm:$0xff]
        %v694 = vld [vmem:[%s321 + $0x90] sm:$0xff]
        %v695 = vld [vmem:[%s321 + $0x98] sm:$0xff]
        %v696 = vld [vmem:[%s321 + $0xa0] sm:$0xff]
        %v697 = vld [vmem:[%s321 + $0xa8] sm:$0xff]
        %v698 = vld [vmem:[%s321 + $0xb0] sm:$0xff]
        %v699 = vld [vmem:[%s321 + $0xb8] sm:$0xff]
        %v700 = vld [vmem:[%s321 + $0xc0] sm:$0xff]
        %v701 = vld [vmem:[%s321 + $0xc8] sm:$0xff]
        %v702 = vld [vmem:[%s321 + $0xd0] sm:$0xff]
        %v703 = vld [vmem:[%s321 + $0xd8] sm:$0xff]
        %v704 = vld [vmem:[%s321 + $0xe0] sm:$0xff]
        %v705 = vld [vmem:[%s321 + $0xe8] sm:$0xff]
        %v706 = vld [vmem:[%s321 + $0xf0] sm:$0xff]
        %v707 = vld [vmem:[%s321 + $0xf8] sm:$0xff]
        %v708 = vld [vmem:[%s372] sm:$0xf]
        %v710 = vperm.slane %v708, 0
        %v711 = vperm.slane %v708, 1
        %v712 = vperm.slane %v708, 2
        %v713 = vperm.slane %v708, 3
        %v750 = vunpack.c.l.b16 %v676
        %v751 = vunpack.c.h.b16 %v676
        %v752 = vunpack.c.l.b16 %v677
        %v753 = vunpack.c.h.b16 %v677
        %v754 = vunpack.c.l.b16 %v678
        %v755 = vunpack.c.h.b16 %v678
        %v756 = vunpack.c.l.b16 %v679
        %v757 = vunpack.c.h.b16 %v679
        %v758 = vunpack.c.l.b16 %v680
        %v759 = vunpack.c.h.b16 %v680
        %v760 = vunpack.c.l.b16 %v681
        %v761 = vunpack.c.h.b16 %v681
        %v762 = vunpack.c.l.b16 %v682
        %v763 = vunpack.c.h.b16 %v682
        %v764 = vunpack.c.l.b16 %v683
        %v765 = vunpack.c.h.b16 %v683
        %v766 = vunpack.c.l.b16 %v684
        %v767 = vunpack.c.h.b16 %v684
        %v768 = vunpack.c.l.b16 %v685
        %v769 = vunpack.c.h.b16 %v685
        %v770 = vunpack.c.l.b16 %v686
        %v771 = vunpack.c.h.b16 %v686
        %v772 = vunpack.c.l.b16 %v687
        %v773 = vunpack.c.h.b16 %v687
        %v774 = vunpack.c.l.b16 %v688
        %v775 = vunpack.c.h.b16 %v688
        %v776 = vunpack.c.l.b16 %v689
        %v777 = vunpack.c.h.b16 %v689
        %v778 = vunpack.c.l.b16 %v690
        %v779 = vunpack.c.h.b16 %v690
        %v780 = vunpack.c.l.b16 %v691
        %v781 = vunpack.c.h.b16 %v691
        %v782 = vunpack.c.l.b16 %v692
        %v783 = vunpack.c.h.b16 %v692
        %v784 = vunpack.c.l.b16 %v693
        %v785 = vunpack.c.h.b16 %v693
        %v786 = vunpack.c.l.b16 %v694
        %v787 = vunpack.c.h.b16 %v694
        %v788 = vunpack.c.l.b16 %v695
        %v789 = vunpack.c.h.b16 %v695
        %v790 = vunpack.c.l.b16 %v696
        %v791 = vunpack.c.h.b16 %v696
        %v792 = vunpack.c.l.b16 %v697
        %v793 = vunpack.c.h.b16 %v697
        %v794 = vunpack.c.l.b16 %v698
        %v795 = vunpack.c.h.b16 %v698
        %v796 = vunpack.c.l.b16 %v699
        %v797 = vunpack.c.h.b16 %v699
        %v798 = vunpack.c.l.b16 %v700
        %v799 = vunpack.c.h.b16 %v700
        %v800 = vunpack.c.l.b16 %v701
        %v801 = vunpack.c.h.b16 %v701
        %v802 = vunpack.c.l.b16 %v702
        %v803 = vunpack.c.h.b16 %v702
        %v804 = vunpack.c.l.b16 %v703
        %v805 = vunpack.c.h.b16 %v703
        %v806 = vunpack.c.l.b16 %v704
        %v807 = vunpack.c.h.b16 %v704
        %v808 = vunpack.c.l.b16 %v705
        %v809 = vunpack.c.h.b16 %v705
        %v810 = vunpack.c.l.b16 %v706
        %v811 = vunpack.c.h.b16 %v706
        %v812 = vunpack.c.l.b16 %v707
        %v813 = vunpack.c.h.b16 %v707
        %v814 = vpack.c.b16 %v754, %v750
        %v815 = vpack.c.b16 %v755, %v751
        %v816 = vpack.c.b16 %v756, %v752
        %v817 = vpack.c.b16 %v757, %v753
        %v818 = vpack.c.b16 %v762, %v758
        %v819 = vpack.c.b16 %v763, %v759
        %v820 = vpack.c.b16 %v764, %v760
        %v821 = vpack.c.b16 %v765, %v761
        %v822 = vpack.c.b16 %v770, %v766
        %v823 = vpack.c.b16 %v771, %v767
        %v824 = vpack.c.b16 %v772, %v768
        %v825 = vpack.c.b16 %v773, %v769
        %v826 = vpack.c.b16 %v778, %v774
        %v827 = vpack.c.b16 %v779, %v775
        %v828 = vpack.c.b16 %v780, %v776
        %v829 = vpack.c.b16 %v781, %v777
        %v830 = vpack.c.b16 %v786, %v782
        %v831 = vpack.c.b16 %v787, %v783
        %v832 = vpack.c.b16 %v788, %v784
        %v833 = vpack.c.b16 %v789, %v785
        %v834 = vpack.c.b16 %v794, %v790
        %v835 = vpack.c.b16 %v795, %v791
        %v836 = vpack.c.b16 %v796, %v792
        %v837 = vpack.c.b16 %v797, %v793
        %v838 = vpack.c.b16 %v802, %v798
        %v839 = vpack.c.b16 %v803, %v799
        %v840 = vpack.c.b16 %v804, %v800
        %v841 = vpack.c.b16 %v805, %v801
        %v842 = vpack.c.b16 %v810, %v806
        %v843 = vpack.c.b16 %v811, %v807
        %v844 = vpack.c.b16 %v812, %v808
        %v845 = vpack.c.b16 %v813, %v809
        %878 = vmatpush.bf16.msra.mxu0 %v842
        %879 = vmatpush.bf16.msra.mxu0 %v838
        %880 = vmatpush.bf16.msra.mxu0 %v834
        %881 = vmatpush.bf16.msra.mxu0 %v830
        %882 = vmatpush.bf16.msra.mxu0 %v826
        %883 = vmatpush.bf16.msra.mxu0 %v822
        %884 = vmatpush.bf16.msra.mxu0 %v818
        %885 = vmatpush.bf16.msra.mxu0 %v814
        %886 = vmatmul.bf16.gmra.mxu0 %v668
        %v887 = vpop.f32.mrf.mxu0
        %v888 = vadd.f32 %v710, %v887
        %v889 = vpop.f32.mrf.mxu0
        %v890 = vadd.f32 %v710, %v889
        %891 = vmatmul.bf16.gmra.mxu0 %v669
        %v892 = vpop.f32.mrf.mxu0
        %v893 = vadd.f32 %v710, %v892
        %v894 = vpop.f32.mrf.mxu0
        %v895 = vadd.f32 %v710, %v894
        %896 = vmatmul.bf16.gmra.mxu0 %v670
        %v897 = vpop.f32.mrf.mxu0
        %v898 = vadd.f32 %v710, %v897
        %v899 = vpop.f32.mrf.mxu0
        %v900 = vadd.f32 %v710, %v899
        %901 = vmatmul.bf16.gmra.mxu0 %v671
        %v902 = vpop.f32.mrf.mxu0
        %v903 = vadd.f32 %v710, %v902
        %v904 = vpop.f32.mrf.mxu0
        %v905 = vadd.f32 %v710, %v904
        %906 = vmatmul.bf16.gmra.mxu0 %v672
        %v907 = vpop.f32.mrf.mxu0
        %v908 = vadd.f32 %v710, %v907
        %v909 = vpop.f32.mrf.mxu0
        %v910 = vadd.f32 %v710, %v909
        %911 = vmatmul.bf16.gmra.mxu0 %v673
        %v912 = vpop.f32.mrf.mxu0
        %v913 = vadd.f32 %v710, %v912
        %v914 = vpop.f32.mrf.mxu0
        %v915 = vadd.f32 %v710, %v914
        %916 = vmatmul.bf16.gmra.mxu0 %v674
        %v917 = vpop.f32.mrf.mxu0
        %v918 = vadd.f32 %v710, %v917
        %v919 = vpop.f32.mrf.mxu0
        %v920 = vadd.f32 %v710, %v919
        %921 = vmatmul.bf16.gmra.mxu0 %v675
        %v922 = vpop.f32.mrf.mxu0
        %v923 = vadd.f32 %v710, %v922
        %v924 = vpop.f32.mrf.mxu0
        %v925 = vadd.f32 %v710, %v924
        %926 = vdwg.mxu0
        %927 = vmatpush.bf16.msra.mxu0 %v843
        %928 = vmatpush.bf16.msra.mxu0 %v839
        %929 = vmatpush.bf16.msra.mxu0 %v835
        %930 = vmatpush.bf16.msra.mxu0 %v831
        %931 = vmatpush.bf16.msra.mxu0 %v827
        %932 = vmatpush.bf16.msra.mxu0 %v823
        %933 = vmatpush.bf16.msra.mxu0 %v819
        %934 = vmatpush.bf16.msra.mxu0 %v815
        %935 = vmatmul.bf16.gmra.mxu0 %v668
        %v936 = vpop.f32.mrf.mxu0
        %v937 = vadd.f32 %v711, %v936
        %v938 = vpop.f32.mrf.mxu0
        %v939 = vadd.f32 %v711, %v938
        %940 = vmatmul.bf16.gmra.mxu0 %v669
        %v941 = vpop.f32.mrf.mxu0
        %v942 = vadd.f32 %v711, %v941
        %v943 = vpop.f32.mrf.mxu0
        %v944 = vadd.f32 %v711, %v943
        %945 = vmatmul.bf16.gmra.mxu0 %v670
        %v946 = vpop.f32.mrf.mxu0
        %v947 = vadd.f32 %v711, %v946
        %v948 = vpop.f32.mrf.mxu0
        %v949 = vadd.f32 %v711, %v948
        %950 = vmatmul.bf16.gmra.mxu0 %v671
        %v951 = vpop.f32.mrf.mxu0
        %v952 = vadd.f32 %v711, %v951
        %v953 = vpop.f32.mrf.mxu0
        %v954 = vadd.f32 %v711, %v953
        %955 = vmatmul.bf16.gmra.mxu0 %v672
        %v956 = vpop.f32.mrf.mxu0
        %v957 = vadd.f32 %v711, %v956
        %v958 = vpop.f32.mrf.mxu0
        %v959 = vadd.f32 %v711, %v958
        %960 = vmatmul.bf16.gmra.mxu0 %v673
        %v961 = vpop.f32.mrf.mxu0
        %v962 = vadd.f32 %v711, %v961
        %v963 = vpop.f32.mrf.mxu0
        %v964 = vadd.f32 %v711, %v963
        %965 = vmatmul.bf16.gmra.mxu0 %v674
        %v966 = vpop.f32.mrf.mxu0
        %v967 = vadd.f32 %v711, %v966
        %v968 = vpop.f32.mrf.mxu0
        %v969 = vadd.f32 %v711, %v968
        %970 = vmatmul.bf16.gmra.mxu0 %v675
        %v971 = vpop.f32.mrf.mxu0
        %v972 = vadd.f32 %v711, %v971
        %v973 = vpop.f32.mrf.mxu0
        %v974 = vadd.f32 %v711, %v973
        %975 = vdwg.mxu0
        %976 = vmatpush.bf16.msra.mxu0 %v844
        %977 = vmatpush.bf16.msra.mxu0 %v840
        %978 = vmatpush.bf16.msra.mxu0 %v836
        %979 = vmatpush.bf16.msra.mxu0 %v832
        %980 = vmatpush.bf16.msra.mxu0 %v828
        %981 = vmatpush.bf16.msra.mxu0 %v824
        %982 = vmatpush.bf16.msra.mxu0 %v820
        %983 = vmatpush.bf16.msra.mxu0 %v816
        %984 = vmatmul.bf16.gmra.mxu0 %v668
        %v985 = vpop.f32.mrf.mxu0
        %v986 = vadd.f32 %v712, %v985
        %v987 = vpop.f32.mrf.mxu0
        %v988 = vadd.f32 %v712, %v987
        %989 = vmatmul.bf16.gmra.mxu0 %v669
        %v990 = vpop.f32.mrf.mxu0
        %v991 = vadd.f32 %v712, %v990
        %v992 = vpop.f32.mrf.mxu0
        %v993 = vadd.f32 %v712, %v992
        %994 = vmatmul.bf16.gmra.mxu0 %v670
        %v995 = vpop.f32.mrf.mxu0
        %v996 = vadd.f32 %v712, %v995
        %v997 = vpop.f32.mrf.mxu0
        %v998 = vadd.f32 %v712, %v997
        %999 = vmatmul.bf16.gmra.mxu0 %v671
        %v1000 = vpop.f32.mrf.mxu0
        %v1001 = vadd.f32 %v712, %v1000
        %v1002 = vpop.f32.mrf.mxu0
        %v1003 = vadd.f32 %v712, %v1002
        %1004 = vmatmul.bf16.gmra.mxu0 %v672
        %v1005 = vpop.f32.mrf.mxu0
        %v1006 = vadd.f32 %v712, %v1005
        %v1007 = vpop.f32.mrf.mxu0
        %v1008 = vadd.f32 %v712, %v1007
        %1009 = vmatmul.bf16.gmra.mxu0 %v673
        %v1010 = vpop.f32.mrf.mxu0
        %v1011 = vadd.f32 %v712, %v1010
        %v1012 = vpop.f32.mrf.mxu0
        %v1013 = vadd.f32 %v712, %v1012
        %1014 = vmatmul.bf16.gmra.mxu0 %v674
        %v1015 = vpop.f32.mrf.mxu0
        %v1016 = vadd.f32 %v712, %v1015
        %v1017 = vpop.f32.mrf.mxu0
        %v1018 = vadd.f32 %v712, %v1017
        %1019 = vmatmul.bf16.gmra.mxu0 %v675
        %v1020 = vpop.f32.mrf.mxu0
        %v1021 = vadd.f32 %v712, %v1020
        %v1022 = vpop.f32.mrf.mxu0
        %v1023 = vadd.f32 %v712, %v1022
        %1024 = vdwg.mxu0
        %1025 = vmatpush.bf16.msra.mxu0 %v845
        %1026 = vmatpush.bf16.msra.mxu0 %v841
        %1027 = vmatpush.bf16.msra.mxu0 %v837
        %1028 = vmatpush.bf16.msra.mxu0 %v833
        %1029 = vmatpush.bf16.msra.mxu0 %v829
        %1030 = vmatpush.bf16.msra.mxu0 %v825
        %1031 = vmatpush.bf16.msra.mxu0 %v821
        %1032 = vmatpush.bf16.msra.mxu0 %v817
        %1033 = vmatmul.bf16.gmra.mxu0 %v668
        %v1034 = vpop.f32.mrf.mxu0
        %v1035 = vadd.f32 %v713, %v1034
        %v1036 = vpop.f32.mrf.mxu0
        %v1037 = vadd.f32 %v713, %v1036
        %1038 = vmatmul.bf16.gmra.mxu0 %v669
        %v1039 = vpop.f32.mrf.mxu0
        %v1040 = vadd.f32 %v713, %v1039
        %v1041 = vpop.f32.mrf.mxu0
        %v1042 = vadd.f32 %v713, %v1041
        %1043 = vmatmul.bf16.gmra.mxu0 %v670
        %v1044 = vpop.f32.mrf.mxu0
        %v1045 = vadd.f32 %v713, %v1044
        %v1046 = vpop.f32.mrf.mxu0
        %v1047 = vadd.f32 %v713, %v1046
        %1048 = vmatmul.bf16.gmra.mxu0 %v671
        %v1049 = vpop.f32.mrf.mxu0
        %v1050 = vadd.f32 %v713, %v1049
        %v1051 = vpop.f32.mrf.mxu0
        %v1052 = vadd.f32 %v713, %v1051
        %1053 = vmatmul.bf16.gmra.mxu0 %v672
        %v1054 = vpop.f32.mrf.mxu0
        %v1055 = vadd.f32 %v713, %v1054
        %v1056 = vpop.f32.mrf.mxu0
        %v1057 = vadd.f32 %v713, %v1056
        %1058 = vmatmul.bf16.gmra.mxu0 %v673
        %v1059 = vpop.f32.mrf.mxu0
        %v1060 = vadd.f32 %v713, %v1059
        %v1061 = vpop.f32.mrf.mxu0
        %v1062 = vadd.f32 %v713, %v1061
        %1063 = vmatmul.bf16.gmra.mxu0 %v674
        %v1064 = vpop.f32.mrf.mxu0
        %v1065 = vadd.f32 %v713, %v1064
        %v1066 = vpop.f32.mrf.mxu0
        %v1067 = vadd.f32 %v713, %v1066
        %1068 = vmatmul.bf16.gmra.mxu0 %v675
        %v1069 = vpop.f32.mrf.mxu0
        %v1070 = vadd.f32 %v713, %v1069
        %v1071 = vpop.f32.mrf.mxu0
        %v1072 = vadd.f32 %v713, %v1071
        %1073 = vdwg.mxu0
        %1074 = vst [vmem:[#allocation3] sm:$0xff] %v888
        %1075 = vst [vmem:[#allocation3 + $0x8] sm:$0xff] %v937
        %1076 = vst [vmem:[#allocation3 + $0x10] sm:$0xff] %v986
        %1077 = vst [vmem:[#allocation3 + $0x18] sm:$0xff] %v1035
        %1078 = vst [vmem:[#allocation3 + $0x20] sm:$0xff] %v890
        %1079 = vst [vmem:[#allocation3 + $0x28] sm:$0xff] %v939
        %1080 = vst [vmem:[#allocation3 + $0x30] sm:$0xff] %v988
        %1081 = vst [vmem:[#allocation3 + $0x38] sm:$0xff] %v1037
        %1082 = vst [vmem:[#allocation3 + $0x40] sm:$0xff] %v893
        %1083 = vst [vmem:[#allocation3 + $0x48] sm:$0xff] %v942
        %1084 = vst [vmem:[#allocation3 + $0x50] sm:$0xff] %v991
        %1085 = vst [vmem:[#allocation3 + $0x58] sm:$0xff] %v1040
        %1086 = vst [vmem:[#allocation3 + $0x60] sm:$0xff] %v895
        %1087 = vst [vmem:[#allocation3 + $0x68] sm:$0xff] %v944
        %1088 = vst [vmem:[#allocation3 + $0x70] sm:$0xff] %v993
        %1089 = vst [vmem:[#allocation3 + $0x78] sm:$0xff] %v1042
        %1090 = vst [vmem:[#allocation3 + $0x80] sm:$0xff] %v898
        %1091 = vst [vmem:[#allocation3 + $0x88] sm:$0xff] %v947
        %1092 = vst [vmem:[#allocation3 + $0x90] sm:$0xff] %v996
        %1093 = vst [vmem:[#allocation3 + $0x98] sm:$0xff] %v1045
        %1094 = vst [vmem:[#allocation3 + $0xa0] sm:$0xff] %v900
        %1095 = vst [vmem:[#allocation3 + $0xa8] sm:$0xff] %v949
        %1096 = vst [vmem:[#allocation3 + $0xb0] sm:$0xff] %v998
        %1097 = vst [vmem:[#allocation3 + $0xb8] sm:$0xff] %v1047
        %1098 = vst [vmem:[#allocation3 + $0xc0] sm:$0xff] %v903
        %1099 = vst [vmem:[#allocation3 + $0xc8] sm:$0xff] %v952
        %1100 = vst [vmem:[#allocation3 + $0xd0] sm:$0xff] %v1001
        %1101 = vst [vmem:[#allocation3 + $0xd8] sm:$0xff] %v1050
        %1102 = vst [vmem:[#allocation3 + $0xe0] sm:$0xff] %v905
        %1103 = vst [vmem:[#allocation3 + $0xe8] sm:$0xff] %v954
        %1104 = vst [vmem:[#allocation3 + $0xf0] sm:$0xff] %v1003
        %1105 = vst [vmem:[#allocation3 + $0xf8] sm:$0xff] %v1052
        %1106 = vst [vmem:[#allocation3 + $0x100] sm:$0xff] %v908
        %1107 = vst [vmem:[#allocation3 + $0x108] sm:$0xff] %v957
        %1108 = vst [vmem:[#allocation3 + $0x110] sm:$0xff] %v1006
        %1109 = vst [vmem:[#allocation3 + $0x118] sm:$0xff] %v1055
        %1110 = vst [vmem:[#allocation3 + $0x120] sm:$0xff] %v910
        %1111 = vst [vmem:[#allocation3 + $0x128] sm:$0xff] %v959
        %1112 = vst [vmem:[#allocation3 + $0x130] sm:$0xff] %v1008
        %1113 = vst [vmem:[#allocation3 + $0x138] sm:$0xff] %v1057
        %1114 = vst [vmem:[#allocation3 + $0x140] sm:$0xff] %v913
        %1115 = vst [vmem:[#allocation3 + $0x148] sm:$0xff] %v962
        %1116 = vst [vmem:[#allocation3 + $0x150] sm:$0xff] %v1011
        %1117 = vst [vmem:[#allocation3 + $0x158] sm:$0xff] %v1060
        %1118 = vst [vmem:[#allocation3 + $0x160] sm:$0xff] %v915
        %1119 = vst [vmem:[#allocation3 + $0x168] sm:$0xff] %v964
        %1120 = vst [vmem:[#allocation3 + $0x170] sm:$0xff] %v1013
        %1121 = vst [vmem:[#allocation3 + $0x178] sm:$0xff] %v1062
        %1122 = vst [vmem:[#allocation3 + $0x180] sm:$0xff] %v918
        %1123 = vst [vmem:[#allocation3 + $0x188] sm:$0xff] %v967
        %1124 = vst [vmem:[#allocation3 + $0x190] sm:$0xff] %v1016
        %1125 = vst [vmem:[#allocation3 + $0x198] sm:$0xff] %v1065
        %1126 = vst [vmem:[#allocation3 + $0x1a0] sm:$0xff] %v920
        %1127 = vst [vmem:[#allocation3 + $0x1a8] sm:$0xff] %v969
        %1128 = vst [vmem:[#allocation3 + $0x1b0] sm:$0xff] %v1018
        %1129 = vst [vmem:[#allocation3 + $0x1b8] sm:$0xff] %v1067
        %1130 = vst [vmem:[#allocation3 + $0x1c0] sm:$0xff] %v923
        %1131 = vst [vmem:[#allocation3 + $0x1c8] sm:$0xff] %v972
        %1132 = vst [vmem:[#allocation3 + $0x1d0] sm:$0xff] %v1021
        %1133 = vst [vmem:[#allocation3 + $0x1d8] sm:$0xff] %v1070
        %1134 = vst [vmem:[#allocation3 + $0x1e0] sm:$0xff] %v925
        %1135 = vst [vmem:[#allocation3 + $0x1e8] sm:$0xff] %v974
        %1136 = vst [vmem:[#allocation3 + $0x1f0] sm:$0xff] %v1023
        %1137 = vst [vmem:[#allocation3 + $0x1f8] sm:$0xff] %v1072
        loop: start=0, step=1, limit=16
        $region65: #{tpu_custom_call.1} parent=51 // loop_pre_header
          _
        $region66: #{tpu_custom_call.1} parent=51 // loop_header
          %s1139 = sphi 0, %s1143
          %p1140 = scmp.ge.s32.totalorder %s1139, 16
          %v1144 = vphi 0.0, %v1467
          %v1145 = vphi 0.0, %v1465
        $region67: #{tpu_custom_call.1} parent=51 // loop_header_branch
          %1142 = sbr.rel (%p1140) target = $region71
        $region68: #{tpu_custom_call.1} parent=51 // loop_body
          %s1146 = smul.u32 %s1139, 8
          %s1147 = sshra.s32 %s1146, 3
          %s1148 = sand.u32 %s1146, 7
          %s1149 = smul.u32 %s1147, 4
          %s1150 = smul.addr %s1149, 8
          %s1151 = scalar_lea.vmem [#allocation3], %s1150
          %v1152 = vld [vmem:[%s1151] sm:$0xff]
          %v1153 = vld [vmem:[%s1151 + $0x8] sm:$0xff]
          %v1154 = vld [vmem:[%s1151 + $0x10] sm:$0xff]
          %v1155 = vld [vmem:[%s1151 + $0x18] sm:$0xff]
          %v1156 = vpack.c.bf16 %v1144, %v1144
          %v1157 = vld [vmem:[%s331] sm:$0xff]
          %v1158 = vld [vmem:[%s331 + $0x8] sm:$0xff]
          %v1159 = vld [vmem:[%s331 + $0x10] sm:$0xff]
          %v1160 = vld [vmem:[%s331 + $0x18] sm:$0xff]
          %v1161 = vld [vmem:[%s331 + $0x20] sm:$0xff]
          %v1162 = vld [vmem:[%s331 + $0x28] sm:$0xff]
          %v1163 = vld [vmem:[%s331 + $0x30] sm:$0xff]
          %v1164 = vld [vmem:[%s331 + $0x38] sm:$0xff]
          %v1165 = vld [vmem:[%s331 + $0x40] sm:$0xff]
          %v1166 = vld [vmem:[%s331 + $0x48] sm:$0xff]
          %v1167 = vld [vmem:[%s331 + $0x50] sm:$0xff]
          %v1168 = vld [vmem:[%s331 + $0x58] sm:$0xff]
          %v1169 = vld [vmem:[%s331 + $0x60] sm:$0xff]
          %v1170 = vld [vmem:[%s331 + $0x68] sm:$0xff]
          %v1171 = vld [vmem:[%s331 + $0x70] sm:$0xff]
          %v1172 = vld [vmem:[%s331 + $0x78] sm:$0xff]
          %v1173 = vld [vmem:[%s331 + $0x80] sm:$0xff]
          %v1174 = vld [vmem:[%s331 + $0x88] sm:$0xff]
          %v1175 = vld [vmem:[%s331 + $0x90] sm:$0xff]
          %v1176 = vld [vmem:[%s331 + $0x98] sm:$0xff]
          %v1177 = vld [vmem:[%s331 + $0xa0] sm:$0xff]
          %v1178 = vld [vmem:[%s331 + $0xa8] sm:$0xff]
          %v1179 = vld [vmem:[%s331 + $0xb0] sm:$0xff]
          %v1180 = vld [vmem:[%s331 + $0xb8] sm:$0xff]
          %v1181 = vld [vmem:[%s331 + $0xc0] sm:$0xff]
          %v1182 = vld [vmem:[%s331 + $0xc8] sm:$0xff]
          %v1183 = vld [vmem:[%s331 + $0xd0] sm:$0xff]
          %v1184 = vld [vmem:[%s331 + $0xd8] sm:$0xff]
          %v1185 = vld [vmem:[%s331 + $0xe0] sm:$0xff]
          %v1186 = vld [vmem:[%s331 + $0xe8] sm:$0xff]
          %v1187 = vld [vmem:[%s331 + $0xf0] sm:$0xff]
          %v1188 = vld [vmem:[%s331 + $0xf8] sm:$0xff]
          %v1221 = vunpack.c.l.b16 %v1157
          %v1222 = vunpack.c.h.b16 %v1157
          %v1223 = vunpack.c.l.b16 %v1158
          %v1224 = vunpack.c.h.b16 %v1158
          %v1225 = vunpack.c.l.b16 %v1159
          %v1226 = vunpack.c.h.b16 %v1159
          %v1227 = vunpack.c.l.b16 %v1160
          %v1228 = vunpack.c.h.b16 %v1160
          %v1229 = vunpack.c.l.b16 %v1161
          %v1230 = vunpack.c.h.b16 %v1161
          %v1231 = vunpack.c.l.b16 %v1162
          %v1232 = vunpack.c.h.b16 %v1162
          %v1233 = vunpack.c.l.b16 %v1163
          %v1234 = vunpack.c.h.b16 %v1163
          %v1235 = vunpack.c.l.b16 %v1164
          %v1236 = vunpack.c.h.b16 %v1164
          %v1237 = vunpack.c.l.b16 %v1165
          %v1238 = vunpack.c.h.b16 %v1165
          %v1239 = vunpack.c.l.b16 %v1166
          %v1240 = vunpack.c.h.b16 %v1166
          %v1241 = vunpack.c.l.b16 %v1167
          %v1242 = vunpack.c.h.b16 %v1167
          %v1243 = vunpack.c.l.b16 %v1168
          %v1244 = vunpack.c.h.b16 %v1168
          %v1245 = vunpack.c.l.b16 %v1169
          %v1246 = vunpack.c.h.b16 %v1169
          %v1247 = vunpack.c.l.b16 %v1170
          %v1248 = vunpack.c.h.b16 %v1170
          %v1249 = vunpack.c.l.b16 %v1171
          %v1250 = vunpack.c.h.b16 %v1171
          %v1251 = vunpack.c.l.b16 %v1172
          %v1252 = vunpack.c.h.b16 %v1172
          %v1253 = vunpack.c.l.b16 %v1173
          %v1254 = vunpack.c.h.b16 %v1173
          %v1255 = vunpack.c.l.b16 %v1174
          %v1256 = vunpack.c.h.b16 %v1174
          %v1257 = vunpack.c.l.b16 %v1175
          %v1258 = vunpack.c.h.b16 %v1175
          %v1259 = vunpack.c.l.b16 %v1176
          %v1260 = vunpack.c.h.b16 %v1176
          %v1261 = vunpack.c.l.b16 %v1177
          %v1262 = vunpack.c.h.b16 %v1177
          %v1263 = vunpack.c.l.b16 %v1178
          %v1264 = vunpack.c.h.b16 %v1178
          %v1265 = vunpack.c.l.b16 %v1179
          %v1266 = vunpack.c.h.b16 %v1179
          %v1267 = vunpack.c.l.b16 %v1180
          %v1268 = vunpack.c.h.b16 %v1180
          %v1269 = vunpack.c.l.b16 %v1181
          %v1270 = vunpack.c.h.b16 %v1181
          %v1271 = vunpack.c.l.b16 %v1182
          %v1272 = vunpack.c.h.b16 %v1182
          %v1273 = vunpack.c.l.b16 %v1183
          %v1274 = vunpack.c.h.b16 %v1183
          %v1275 = vunpack.c.l.b16 %v1184
          %v1276 = vunpack.c.h.b16 %v1184
          %v1277 = vunpack.c.l.b16 %v1185
          %v1278 = vunpack.c.h.b16 %v1185
          %v1279 = vunpack.c.l.b16 %v1186
          %v1280 = vunpack.c.h.b16 %v1186
          %v1281 = vunpack.c.l.b16 %v1187
          %v1282 = vunpack.c.h.b16 %v1187
          %v1283 = vunpack.c.l.b16 %v1188
          %v1284 = vunpack.c.h.b16 %v1188
          %v1285 = vpack.c.b16 %v1225, %v1221
          %v1286 = vpack.c.b16 %v1226, %v1222
          %v1287 = vpack.c.b16 %v1227, %v1223
          %v1288 = vpack.c.b16 %v1228, %v1224
          %v1289 = vpack.c.b16 %v1233, %v1229
          %v1290 = vpack.c.b16 %v1234, %v1230
          %v1291 = vpack.c.b16 %v1235, %v1231
          %v1292 = vpack.c.b16 %v1236, %v1232
          %v1293 = vpack.c.b16 %v1241, %v1237
          %v1294 = vpack.c.b16 %v1242, %v1238
          %v1295 = vpack.c.b16 %v1243, %v1239
          %v1296 = vpack.c.b16 %v1244, %v1240
          %v1297 = vpack.c.b16 %v1249, %v1245
          %v1298 = vpack.c.b16 %v1250, %v1246
          %v1299 = vpack.c.b16 %v1251, %v1247
          %v1300 = vpack.c.b16 %v1252, %v1248
          %v1301 = vpack.c.b16 %v1257, %v1253
          %v1302 = vpack.c.b16 %v1258, %v1254
          %v1303 = vpack.c.b16 %v1259, %v1255
          %v1304 = vpack.c.b16 %v1260, %v1256
          %v1305 = vpack.c.b16 %v1265, %v1261
          %v1306 = vpack.c.b16 %v1266, %v1262
          %v1307 = vpack.c.b16 %v1267, %v1263
          %v1308 = vpack.c.b16 %v1268, %v1264
          %v1309 = vpack.c.b16 %v1273, %v1269
          %v1310 = vpack.c.b16 %v1274, %v1270
          %v1311 = vpack.c.b16 %v1275, %v1271
          %v1312 = vpack.c.b16 %v1276, %v1272
          %v1313 = vpack.c.b16 %v1281, %v1277
          %v1314 = vpack.c.b16 %v1282, %v1278
          %v1315 = vpack.c.b16 %v1283, %v1279
          %v1316 = vpack.c.b16 %v1284, %v1280
          %1349 = vmatpush.bf16.msra.mxu0 %v1313
          %1350 = vmatpush.bf16.msra.mxu0 %v1309
          %1351 = vmatpush.bf16.msra.mxu0 %v1305
          %1352 = vmatpush.bf16.msra.mxu0 %v1301
          %1353 = vmatpush.bf16.msra.mxu0 %v1297
          %1354 = vmatpush.bf16.msra.mxu0 %v1293
          %1355 = vmatpush.bf16.msra.mxu0 %v1289
          %1356 = vmatpush.bf16.msra.mxu0 %v1285
          %1357 = vmatmul.bf16.gmra.mxu0 %v1156
          %v1358 = vpop.f32.mrf.mxu0
          %v1359 = vadd.f32 0.0, %v1358
          %v1360 = vpop.f32.mrf.mxu0
          %1361 = vdwg.mxu0
          %1362 = vmatpush.bf16.msra.mxu0 %v1314
          %1363 = vmatpush.bf16.msra.mxu0 %v1310
          %1364 = vmatpush.bf16.msra.mxu0 %v1306
          %1365 = vmatpush.bf16.msra.mxu0 %v1302
          %1366 = vmatpush.bf16.msra.mxu0 %v1298
          %1367 = vmatpush.bf16.msra.mxu0 %v1294
          %1368 = vmatpush.bf16.msra.mxu0 %v1290
          %1369 = vmatpush.bf16.msra.mxu0 %v1286
          %1370 = vmatmul.bf16.gmra.mxu0 %v1156
          %v1371 = vpop.f32.mrf.mxu0
          %v1372 = vadd.f32 0.0, %v1371
          %v1373 = vpop.f32.mrf.mxu0
          %1374 = vdwg.mxu0
          %1375 = vmatpush.bf16.msra.mxu0 %v1315
          %1376 = vmatpush.bf16.msra.mxu0 %v1311
          %1377 = vmatpush.bf16.msra.mxu0 %v1307
          %1378 = vmatpush.bf16.msra.mxu0 %v1303
          %1379 = vmatpush.bf16.msra.mxu0 %v1299
          %1380 = vmatpush.bf16.msra.mxu0 %v1295
          %1381 = vmatpush.bf16.msra.mxu0 %v1291
          %1382 = vmatpush.bf16.msra.mxu0 %v1287
          %1383 = vmatmul.bf16.gmra.mxu0 %v1156
          %v1384 = vpop.f32.mrf.mxu0
          %v1385 = vadd.f32 0.0, %v1384
          %v1386 = vpop.f32.mrf.mxu0
          %1387 = vdwg.mxu0
          %1388 = vmatpush.bf16.msra.mxu0 %v1316
          %1389 = vmatpush.bf16.msra.mxu0 %v1312
          %1390 = vmatpush.bf16.msra.mxu0 %v1308
          %1391 = vmatpush.bf16.msra.mxu0 %v1304
          %1392 = vmatpush.bf16.msra.mxu0 %v1300
          %1393 = vmatpush.bf16.msra.mxu0 %v1296
          %1394 = vmatpush.bf16.msra.mxu0 %v1292
          %1395 = vmatpush.bf16.msra.mxu0 %v1288
          %1396 = vmatmul.bf16.gmra.mxu0 %v1156
          %v1397 = vpop.f32.mrf.mxu0
          %v1398 = vadd.f32 0.0, %v1397
          %v1399 = vpop.f32.mrf.mxu0
          %1400 = vdwg.mxu0
          %v1401 = vadd.f32 %v1152, %v1359
          %v1402 = vadd.f32 %v1153, %v1372
          %v1403 = vadd.f32 %v1154, %v1385
          %v1404 = vadd.f32 %v1155, %v1398
          %v1405 = vxor.u32 %v1401, 2147483648
          %v1406 = vmul.f32 %v1405, 1.442695
          %v1407 = vpow.pop %v1406
          %v1408 = vadd.f32 %v1407, 1.0
          %v1409 = vrcp.pop %v1408
          %v1410 = vmul.f32 %v1408, %v1409
          %v1411 = vsub.f32 1.0, %v1410
          %v1412 = vmul.f32 %v1409, %v1411
          %v1413 = vadd.f32 %v1409, %v1412
          %vm1414 = vweird.f32 %v1408
          %vm1415 = vweird.f32 %v1409
          %vm1416 = vmor %vm1414, %vm1415
          %v1417 = vsel %vm1416, %v1409, %v1413
          %v1418 = vand.u32 2147483647, %v1408
          %vm1419 = vcmp.eq.f32.partialorder %v1418, 8.507059e+37
          %v1420 = vand.u32 %v1408, 2147483648
          %v1421 = vor.u32 1.1754944e-38, %v1420
          %v1422 = vsel %vm1419, %v1421, %v1417
          %v1423 = vmul.f32 1.0, %v1422
          %v1424 = vxor.u32 %v1402, 2147483648
          %v1425 = vmul.f32 %v1424, 1.442695
          %v1426 = vpow.pop %v1425
          %v1427 = vadd.f32 %v1426, 1.0
          %v1428 = vrcp.pop %v1427
          %v1429 = vmul.f32 %v1427, %v1428
          %v1430 = vsub.f32 1.0, %v1429
          %v1431 = vmul.f32 %v1428, %v1430
          %v1432 = vadd.f32 %v1428, %v1431
          %vm1433 = vweird.f32 %v1427
          %vm1434 = vweird.f32 %v1428
          %vm1435 = vmor %vm1433, %vm1434
          %v1436 = vsel %vm1435, %v1428, %v1432
          %v1437 = vand.u32 2147483647, %v1427
          %vm1438 = vcmp.eq.f32.partialorder %v1437, 8.507059e+37
          %v1439 = vand.u32 %v1427, 2147483648
          %v1440 = vor.u32 1.1754944e-38, %v1439
          %v1441 = vsel %vm1438, %v1440, %v1436
          %v1442 = vmul.f32 1.0, %v1441
          %v1443 = vtanh.pop %v1403
          %v1444 = vxor.u32 %v1404, 2147483648
          %v1445 = vmul.f32 %v1444, 1.442695
          %v1446 = vpow.pop %v1445
          %v1447 = vadd.f32 %v1446, 1.0
          %v1448 = vrcp.pop %v1447
          %v1449 = vmul.f32 %v1447, %v1448
          %v1450 = vsub.f32 1.0, %v1449
          %v1451 = vmul.f32 %v1448, %v1450
          %v1452 = vadd.f32 %v1448, %v1451
          %vm1453 = vweird.f32 %v1447
          %vm1454 = vweird.f32 %v1448
          %vm1455 = vmor %vm1453, %vm1454
          %v1456 = vsel %vm1455, %v1448, %v1452
          %v1457 = vand.u32 2147483647, %v1447
          %vm1458 = vcmp.eq.f32.partialorder %v1457, 8.507059e+37
          %v1459 = vand.u32 %v1447, 2147483648
          %v1460 = vor.u32 1.1754944e-38, %v1459
          %v1461 = vsel %vm1458, %v1460, %v1456
          %v1462 = vmul.f32 1.0, %v1461
          %v1463 = vmul.f32 %v1442, %v1145
          %v1464 = vmul.f32 %v1423, %v1443
          %v1465 = vadd.f32 %v1463, %v1464
          %v1466 = vtanh.pop %v1465
          %v1467 = vmul.f32 %v1462, %v1466
          %s1468 = scalar_lea.vmem [#allocation2], %s1146
          %1469 = vst [vmem:[%s1468] sm:$0xff] %v1467
        $region69: #{tpu_custom_call.1} parent=51 // loop_footer
          %s1143 = sadd.s32 1, %s1139
        $region70: #{tpu_custom_call.1} parent=51 // loop_footer_branch
          %1138 = sbr.rel target = $region66
        $region71: #{tpu_custom_call.1} parent=51 // loop_exit
          _
        %p1470 = scmp.eq.s32.totalorder %s26, 2
        // Predicated region
        $region72: #{tpu_custom_call.1} parent=51 // pred_check
          %p1471 = pneg %p1470
        $region73: #{tpu_custom_call.1} parent=51 // pred_check_branch
          %1473 = sbr.rel (%p1471) target = $region75
        $region74: #{tpu_custom_call.1} parent=51 // pred_region
          %v1474 = vld [vmem:[#allocation2] sm:$0xff]
          %v1475 = vld [vmem:[#allocation2 + $0x8] sm:$0xff]
          %v1476 = vld [vmem:[#allocation2 + $0x10] sm:$0xff]
          %v1477 = vld [vmem:[#allocation2 + $0x18] sm:$0xff]
          %v1478 = vld [vmem:[#allocation2 + $0x20] sm:$0xff]
          %v1479 = vld [vmem:[#allocation2 + $0x28] sm:$0xff]
          %v1480 = vld [vmem:[#allocation2 + $0x30] sm:$0xff]
          %v1481 = vld [vmem:[#allocation2 + $0x38] sm:$0xff]
          %v1482 = vld [vmem:[#allocation2 + $0x40] sm:$0xff]
          %v1483 = vld [vmem:[#allocation2 + $0x48] sm:$0xff]
          %v1484 = vld [vmem:[#allocation2 + $0x50] sm:$0xff]
          %v1485 = vld [vmem:[#allocation2 + $0x58] sm:$0xff]
          %v1486 = vld [vmem:[#allocation2 + $0x60] sm:$0xff]
          %v1487 = vld [vmem:[#allocation2 + $0x68] sm:$0xff]
          %v1488 = vld [vmem:[#allocation2 + $0x70] sm:$0xff]
          %v1489 = vld [vmem:[#allocation2 + $0x78] sm:$0xff]
          %v1490 = vpack.c.bf16 %v1475, %v1474
          %v1491 = vpack.c.bf16 %v1477, %v1476
          %v1492 = vpack.c.bf16 %v1479, %v1478
          %v1493 = vpack.c.bf16 %v1481, %v1480
          %v1494 = vpack.c.bf16 %v1483, %v1482
          %v1495 = vpack.c.bf16 %v1485, %v1484
          %v1496 = vpack.c.bf16 %v1487, %v1486
          %v1497 = vpack.c.bf16 %v1489, %v1488
          %v1498 = vld [vmem:[%s6] sm:$0xf]
          %v1499 = vld [vmem:[%s6 + $0x4] sm:$0xf]
          %v1500 = vld [vmem:[%s6 + $0x8] sm:$0xf]
          %v1501 = vld [vmem:[%s6 + $0xc] sm:$0xf]
          %v1502 = vld [vmem:[%s6 + $0x10] sm:$0xf]
          %v1503 = vld [vmem:[%s6 + $0x14] sm:$0xf]
          %v1504 = vld [vmem:[%s6 + $0x18] sm:$0xf]
          %v1505 = vld [vmem:[%s6 + $0x1c] sm:$0xf]
          %v1506 = vld [vmem:[%s6 + $0x20] sm:$0xf]
          %v1507 = vld [vmem:[%s6 + $0x24] sm:$0xf]
          %v1508 = vld [vmem:[%s6 + $0x28] sm:$0xf]
          %v1509 = vld [vmem:[%s6 + $0x2c] sm:$0xf]
          %v1510 = vld [vmem:[%s6 + $0x30] sm:$0xf]
          %v1511 = vld [vmem:[%s6 + $0x34] sm:$0xf]
          %v1512 = vld [vmem:[%s6 + $0x38] sm:$0xf]
          %v1513 = vld [vmem:[%s6 + $0x3c] sm:$0xf]
          %v1514 = vld [vmem:[%s7] sm:$0x1]
          %v1516 = vperm.slane %v1514, 0
          %v1534 = vunpack.c.l.b16 %v1498
          %v1535 = vunpack.c.l.b16 %v1499
          %v1536 = vunpack.c.l.b16 %v1500
          %v1537 = vunpack.c.l.b16 %v1501
          %v1538 = vunpack.c.l.b16 %v1502
          %v1539 = vunpack.c.l.b16 %v1503
          %v1540 = vunpack.c.l.b16 %v1504
          %v1541 = vunpack.c.l.b16 %v1505
          %v1542 = vunpack.c.l.b16 %v1506
          %v1543 = vunpack.c.l.b16 %v1507
          %v1544 = vunpack.c.l.b16 %v1508
          %v1545 = vunpack.c.l.b16 %v1509
          %v1546 = vunpack.c.l.b16 %v1510
          %v1547 = vunpack.c.l.b16 %v1511
          %v1548 = vunpack.c.l.b16 %v1512
          %v1549 = vunpack.c.l.b16 %v1513
          %v1550 = vpack.c.b16 %v1535, %v1534
          %v1551 = vpack.c.b16 %v1537, %v1536
          %v1552 = vpack.c.b16 %v1539, %v1538
          %v1553 = vpack.c.b16 %v1541, %v1540
          %v1554 = vpack.c.b16 %v1543, %v1542
          %v1555 = vpack.c.b16 %v1545, %v1544
          %v1556 = vpack.c.b16 %v1547, %v1546
          %v1557 = vpack.c.b16 %v1549, %v1548
          %1566 = vmatpush.bf16.msra.mxu0 %v1557
          %1567 = vmatpush.bf16.msra.mxu0 %v1556
          %1568 = vmatpush.bf16.msra.mxu0 %v1555
          %1569 = vmatpush.bf16.msra.mxu0 %v1554
          %1570 = vmatpush.bf16.msra.mxu0 %v1553
          %1571 = vmatpush.bf16.msra.mxu0 %v1552
          %1572 = vmatpush.bf16.msra.mxu0 %v1551
          %1573 = vmatpush.bf16.msra.mxu0 %v1550
          %1574 = vmatmul.bf16.gmra.mxu0 %v1490
          %v1575 = vpop.f32.mrf.mxu0
          %v1576 = vadd.f32 %v1516, %v1575
          %v1577 = vpop.f32.mrf.mxu0
          %v1578 = vadd.f32 %v1516, %v1577
          %1579 = vmatmul.bf16.gmra.mxu0 %v1491
          %v1580 = vpop.f32.mrf.mxu0
          %v1581 = vadd.f32 %v1516, %v1580
          %v1582 = vpop.f32.mrf.mxu0
          %v1583 = vadd.f32 %v1516, %v1582
          %1584 = vmatmul.bf16.gmra.mxu0 %v1492
          %v1585 = vpop.f32.mrf.mxu0
          %v1586 = vadd.f32 %v1516, %v1585
          %v1587 = vpop.f32.mrf.mxu0
          %v1588 = vadd.f32 %v1516, %v1587
          %1589 = vmatmul.bf16.gmra.mxu0 %v1493
          %v1590 = vpop.f32.mrf.mxu0
          %v1591 = vadd.f32 %v1516, %v1590
          %v1592 = vpop.f32.mrf.mxu0
          %v1593 = vadd.f32 %v1516, %v1592
          %1594 = vmatmul.bf16.gmra.mxu0 %v1494
          %v1595 = vpop.f32.mrf.mxu0
          %v1596 = vadd.f32 %v1516, %v1595
          %v1597 = vpop.f32.mrf.mxu0
          %v1598 = vadd.f32 %v1516, %v1597
          %1599 = vmatmul.bf16.gmra.mxu0 %v1495
          %v1600 = vpop.f32.mrf.mxu0
          %v1601 = vadd.f32 %v1516, %v1600
          %v1602 = vpop.f32.mrf.mxu0
          %v1603 = vadd.f32 %v1516, %v1602
          %1604 = vmatmul.bf16.gmra.mxu0 %v1496
          %v1605 = vpop.f32.mrf.mxu0
          %v1606 = vadd.f32 %v1516, %v1605
          %v1607 = vpop.f32.mrf.mxu0
          %v1608 = vadd.f32 %v1516, %v1607
          %1609 = vmatmul.bf16.gmra.mxu0 %v1497
          %v1610 = vpop.f32.mrf.mxu0
          %v1611 = vadd.f32 %v1516, %v1610
          %v1612 = vpop.f32.mrf.mxu0
          %v1613 = vadd.f32 %v1516, %v1612
          %1614 = vdwg.mxu0
          %1615 = vst [vmem:[#allocation9] sm:$0xff] %v1576
          %1616 = vst [vmem:[#allocation9 + $0x8] sm:$0xff] %v1578
          %1617 = vst [vmem:[#allocation9 + $0x10] sm:$0xff] %v1581
          %1618 = vst [vmem:[#allocation9 + $0x18] sm:$0xff] %v1583
          %1619 = vst [vmem:[#allocation9 + $0x20] sm:$0xff] %v1586
          %1620 = vst [vmem:[#allocation9 + $0x28] sm:$0xff] %v1588
          %1621 = vst [vmem:[#allocation9 + $0x30] sm:$0xff] %v1591
          %1622 = vst [vmem:[#allocation9 + $0x38] sm:$0xff] %v1593
          %1623 = vst [vmem:[#allocation9 + $0x40] sm:$0xff] %v1596
          %1624 = vst [vmem:[#allocation9 + $0x48] sm:$0xff] %v1598
          %1625 = vst [vmem:[#allocation9 + $0x50] sm:$0xff] %v1601
          %1626 = vst [vmem:[#allocation9 + $0x58] sm:$0xff] %v1603
          %1627 = vst [vmem:[#allocation9 + $0x60] sm:$0xff] %v1606
          %1628 = vst [vmem:[#allocation9 + $0x68] sm:$0xff] %v1608
          %1629 = vst [vmem:[#allocation9 + $0x70] sm:$0xff] %v1611
          %1630 = vst [vmem:[#allocation9 + $0x78] sm:$0xff] %v1613
        $region75: #{tpu_custom_call.1} parent=51 // pred_fallthru
          _
        // Predicated region
        $region76: #{tpu_custom_call.1} parent=51 // pred_check
          %p1631 = pneg %p222
        $region77: #{tpu_custom_call.1} parent=51 // pred_check_branch
          %1633 = sbr.rel (%p1631) target = $region79
        $region78: #{tpu_custom_call.1} parent=51 // pred_region
          %1635 = vsyncadd [#allocation6], 0
          %s1636 = sshll.u32 [#allocation9], 4
          %s1637 = int_to_ptr.vmem [resolvable:$true] %s1636
          %s1638 = sshll.u32 %s8, 4
          %s1639 = int_to_ptr.hbm [resolvable:$true] %s1638
          %1644 = dma.vmem_to_hbm [thread:$0]  %s1637, 2048, %s1639, [#allocation6], 128, 128, 8
        $region79: #{tpu_custom_call.1} parent=51 // pred_fallthru
          _
        // Predicated region
        $region80: #{tpu_custom_call.1} parent=51 // pred_check
          %p1645 = pneg %p222
        $region81: #{tpu_custom_call.1} parent=51 // pred_check_branch
          %1647 = sbr.rel (%p1645) target = $region83
        $region82: #{tpu_custom_call.1} parent=51 // pred_region
          %1649 = dma.done [#allocation6], 2048
        $region83: #{tpu_custom_call.1} parent=51 // pred_fallthru
          _
      $region52: #{tpu_custom_call.1} parent=5 // pred_fallthru
        _
      %p1650 = scmp.le.s32.totalorder 2, %s21
      // Predicated region
      $region84: #{tpu_custom_call.1} parent=5 // pred_check
        %p1651 = pneg %p1650
      $region85: #{tpu_custom_call.1} parent=5 // pred_check_branch
        %1653 = sbr.rel (%p1651) target = $region87
      $region86: #{tpu_custom_call.1} parent=5 // pred_region
        %s1654 = ssub.s32 %s21, 2
      $region87: #{tpu_custom_call.1} parent=5 // pred_fallthru
        _
    $region6: #{tpu_custom_call.1} parent=1 // loop_footer
      %s25 = sadd.s32 1, %s21
    $region7: #{tpu_custom_call.1} parent=1 // loop_footer_branch
      %20 = sbr.rel target = $region3
    $region8: #{tpu_custom_call.1} parent=1 // loop_exit
      _
    %1655 = vsyncpa [#allocation5], 1
    %s1656 = scalar_lea.sflag [#allocation5], 1
    %1657 = vsyncpa %s1656, 1
    %1658 = vsyncpa [#allocation8], 1
    %s1659 = scalar_lea.sflag [#allocation8], 1
    %1660 = vsyncpa %s1659, 1
    %1661 = vsyncpa [#allocation6], 1
    %s1662 = scalar_lea.sflag [#allocation6], 1
    %1663 = vsyncpa %s1662, 1

</llo_original>
